<compile_context>
chip_gen: v6e
topology: v6e:2x2x1
jax: 0.10.0
libtpu: 0.0.40
codegen_flags: <defaults>
</compile_context>

<pallas_src>
import jax
import jax.numpy as jnp
from jax.experimental import pallas as pl
from jax.experimental.pallas import tpu as pltpu

K = 1.0            # Lorentz manifold curvature
INV_K = 1.0 / K
SQRT_K = K ** 0.5
LN_EPS = 1e-5      # torch.nn.LayerNorm default eps
ACOSH_EPS = 1e-7   # clamp for the arccosh argument (self/near-zero distances)

RESIDENT_BT_LIMIT = 8 << 20   # keep the resident B operand modest even on v7x (64 MiB VMEM)


def _round_up(x, m):
    return (x + m - 1) // m * m


# ----------------------------- pass 1: LorentzMLP node features ----------------------
def node_feat_kernel(zs_ref, g1_ref, be1_ref, w1t_ref, w1s_ref, b1_ref,
                     g2_ref, be2_ref, w2t_ref, w2s_ref, b2_ref,
                     a_ref, bt_ref):
    zs = zs_ref[...]                                         # (bm1, E) space part of z
    # NOTE: the input time component never influences the output (layer-0's post-residual
    # time is recomputed by layer-1's HypLayerNorm), so it is elided -- semantics preserved.

    # ---- layer 0: HypLayerNorm -> dropout(id) -> LorentzHypLinear -> +residual -> relu
    mu = jnp.mean(zs, axis=-1, keepdims=True)
    var = jnp.mean((zs - mu) ** 2, axis=-1, keepdims=True)
    xs = (zs - mu) * jax.lax.rsqrt(var + LN_EPS) * g1_ref[...] + be1_ref[...]
    xt = jnp.sqrt(jnp.sum(xs * xs, axis=-1, keepdims=True) + K)
    hs = (xt * w1t_ref[...]
          + jnp.dot(xs, w1s_ref[...], preferred_element_type=jnp.float32)
          + b1_ref[...])
    hs = jnp.maximum(hs + zs, 0.0)                           # residual + relu (space part)

    # ---- layer 1: HypLayerNorm -> LorentzHypLinear (shape changes -> no residual; last
    # ---- layer & applyActOnTheLastLyr=False -> no activation)
    mu = jnp.mean(hs, axis=-1, keepdims=True)
    var = jnp.mean((hs - mu) ** 2, axis=-1, keepdims=True)
    xs = (hs - mu) * jax.lax.rsqrt(var + LN_EPS) * g2_ref[...] + be2_ref[...]
    xt = jnp.sqrt(jnp.sum(xs * xs, axis=-1, keepdims=True) + K)
    os_ = (xt * w2t_ref[...]
           + jnp.dot(xs, w2s_ref[...], preferred_element_type=jnp.float32)
           + b2_ref[...])
    ot = jnp.sqrt(jnp.sum(os_ * os_, axis=-1, keepdims=True) + K)   # Lorentz time

    O = os_.shape[-1]
    # a rows: [ s_i, t_i ]   (time LAST so every slice offset stays 8-aligned)
    a_ref[:, :O] = os_
    a_ref[:, O:] = ot
    # bt cols: [ -s_j, t_j ]  ->  a @ bt = t_i*t_j - s_i.s_j = -<x_i, x_j>_L
    # Lane-dense (D, bm1) store; the small (bm1, O)->(O, bm1) transpose runs on the XLU.
    os_t = os_.T
    bt_ref[:O, :] = -os_t
    # time row recomputed from the transposed space (avoids a (bm1,1)->(1,bm1) relayout)
    bt_ref[O:, :] = jnp.sqrt(jnp.sum(os_t * os_t, axis=0, keepdims=True) + K)


# ----------------------------- pass 2: tiled Lorentz cdist + sigmoid -----------------
def _make_cdist_kernel(bn):
    def cdist_sigmoid_kernel(a_ref, bt_ref, lin_ref, adj_ref):
        # a_ref : (bm, D)  rows i  -> [ s_i, t_i ]
        # bt_ref: (D, Np) resident (or (D, bn) streamed) cols j -> [ -s_j, t_j ]
        w = lin_ref[0]
        b = lin_ref[1]
        if bt_ref.shape[-1] == bn:                 # streamed / exact-fit operand
            btj = bt_ref[...]
        else:                                      # fully resident operand: slice window
            col0 = pl.multiple_of(pl.program_id(1) * bn, 128)
            btj = bt_ref[:, pl.ds(col0, bn)]
        neg_inner = jnp.dot(a_ref[...], btj, preferred_element_type=jnp.float32)
        u = jnp.maximum(neg_inner * INV_K, 1.0 + ACOSH_EPS)
        # cancellation-free arccosh: sqrt((u-1)*(u+1)) avoids the u*u-1 loss near 1
        dist = SQRT_K * jnp.log(u + jnp.sqrt((u - 1.0) * (u + 1.0)))
        t = dist * w + b
        # sigmoid via tanh: one EUP op, no divide (EUP is the binding unit here)
        adj_ref[...] = (0.5 * jnp.tanh(0.5 * t) + 0.5).astype(adj_ref.dtype)
    return cdist_sigmoid_kernel


# ----------------------------- wrapper ------------------------------------------------
def _whole(a):
    # full-array block (grid-invariant), used for the tiny parameter tensors
    return pl.BlockSpec(a.shape, lambda i: (0,) * a.ndim)


def adj_decoder(z, params, out_dtype=jnp.float32):
    # out_dtype=jnp.bfloat16 halves the Np^2 writeback (recommended on v5e/v6e).
    N, d_in = z.shape
    E = d_in - 1
    O = params["w2"].shape[1]
    D = O + 1

    # --- tiling: pad N to a lane-dense multiple of 128, pick the largest tiles that fit
    Np = _round_up(N, 128)
    bm1 = next(b for b in (1024, 512, 256, 128) if Np % b == 0)   # pass-1 row tile
    bm = next(b for b in (512, 256, 128) if Np % b == 0)          # pass-2 output rows
    bn = next(b for b in (2048, 1024, 512, 256, 128) if Np % b == 0)  # output cols (lanes)

    # split z into its space part (the time part is provably unused) and zero-pad rows
    zs = jnp.pad(z[:, 1:], ((0, Np - N), (0, 0))).astype(jnp.float32)
    # split the HypLinear weights into time-row / space-block once, outside the kernels
    w1t, w1s = params["w1"][:1, :], params["w1"][1:, :]
    w2t, w2s = params["w2"][:1, :], params["w2"][1:, :]

    # ---------------- pass 1: node features, emitted directly in cdist layouts ----------
    a_mat, bt_mat = pl.pallas_call(
        node_feat_kernel,
        grid=(Np // bm1,),
        in_specs=[
            pl.BlockSpec((bm1, E), lambda i: (i, 0)),
            _whole(params["g1"]), _whole(params["be1"]),
            _whole(w1t), _whole(w1s), _whole(params["b1"]),
            _whole(params["g2"]), _whole(params["be2"]),
            _whole(w2t), _whole(w2s), _whole(params["b2"]),
        ],
        out_specs=(
            pl.BlockSpec((bm1, D), lambda i: (i, 0)),     # a_mat rows  [ s, t]
            pl.BlockSpec((D, bm1), lambda i: (0, i)),     # bt_mat cols [-s, t] (lane-dense)
        ),
        out_shape=(
            jax.ShapeDtypeStruct((Np, D), jnp.float32),
            jax.ShapeDtypeStruct((D, Np), jnp.float32),
        ),
        compiler_params=pltpu.CompilerParams(dimension_semantics=("parallel",)),
    )(zs, params["g1"], params["be1"], w1t, w1s, params["b1"],
      params["g2"], params["be2"], w2t, w2s, params["b2"])

    lin = params["lin"].reshape(-1).astype(jnp.float32)   # flat (2,) -> SMEM scalars

    # B operand: keep fully VMEM-resident (DMA'd once) when small enough, else stream tiles
    bt_resident = D * Np * 4 <= RESIDENT_BT_LIMIT
    bt_spec = (pl.BlockSpec((D, Np), lambda i, j: (0, 0)) if bt_resident
               else pl.BlockSpec((D, bn), lambda i, j: (0, j)))

    out_bytes = jnp.dtype(out_dtype).itemsize

    # ---------------- pass 2: tiled cdist + linear + sigmoid ----------------
    adj = pl.pallas_call(
        _make_cdist_kernel(bn),
        grid=(Np // bm, Np // bn),
        in_specs=[
            pl.BlockSpec((bm, D), lambda i, j: (i, 0)),
            bt_spec,
            pl.BlockSpec(memory_space=pltpu.MemorySpace.SMEM),
        ],
        out_specs=pl.BlockSpec((bm, bn), lambda i, j: (i, j)),
        out_shape=jax.ShapeDtypeStruct((Np, Np), out_dtype),
        compiler_params=pltpu.CompilerParams(
            dimension_semantics=("parallel", "parallel")),
        cost_estimate=pl.CostEstimate(
            flops=2 * Np * Np * D,
            transcendentals=3 * Np * Np,                    # sqrt + log + tanh per element
            bytes_accessed=Np * Np * out_bytes + 2 * Np * D * 4),
    )(a_mat, bt_mat, lin)

    return adj[:N, :N]


# ----------------------------- pure-JAX reference (correctness check) ----------------
def adj_decoder_ref(z, p):
    def ln(x, g, b):
        xs = x[:, 1:]
        mu = xs.mean(-1, keepdims=True)
        var = ((xs - mu) ** 2).mean(-1, keepdims=True)
        xs = (xs - mu) * jax.lax.rsqrt(var + LN_EPS) * g + b
        xt = jnp.sqrt((xs ** 2).sum(-1, keepdims=True) + K)
        return jnp.concatenate([xt, xs], -1)

    def lin(x, w, b):
        hs = x @ w + b
        ht = jnp.sqrt((hs ** 2).sum(-1, keepdims=True) + K)
        return jnp.concatenate([ht, hs], -1)

    h = ln(z, p["g1"], p["be1"])
    h = lin(h, p["w1"], p["b1"])
    h = jnp.maximum(h + z, 0.0)
    h = ln(h, p["g2"], p["be2"])
    h = lin(h, p["w2"], p["b2"])
    D = h.shape[-1]
    sign = jnp.concatenate([-jnp.ones((1, 1)), jnp.ones((1, D - 1))], -1)
    inner = h @ (h * sign).T
    u = jnp.maximum(-inner / K, 1.0 + ACOSH_EPS)
    d = SQRT_K * jnp.arccosh(u)
    w, b = p["lin"][0], p["lin"][1]
    return jax.nn.sigmoid(d * w + b)


if __name__ == "__main__":
    N = 8            # number of graph nodes
    E = 16           # euc_channels  (space feature dim; Lorentz dim = E+1)
    O = 8            # out_channels  (final space dim; Lorentz dim = O+1)

    key = jax.random.PRNGKey(0)
    k_z, k_w1, k_b1, k_w2, k_b2, k_lin = jax.random.split(key, 6)

    # Input z: valid Lorentz points (time = sqrt(|space|^2 + K)), shape (N, E+1)
    z_space = 0.5 * jax.random.normal(k_z, (N, E), dtype=jnp.float32)
    z_time = jnp.sqrt(jnp.sum(z_space ** 2, axis=-1, keepdims=True) + K)
    z = jnp.concatenate([z_time, z_space], axis=-1)

    params = {
        # HypLayerNorm params (torch default init: gamma=1, beta=0)
        "g1": jnp.ones((1, E), jnp.float32),
        "be1": jnp.zeros((1, E), jnp.float32),
        "g2": jnp.ones((1, E), jnp.float32),
        "be2": jnp.zeros((1, E), jnp.float32),
        # LorentzHypLinear 1: (E+1) -> E   (weights stored as (in, out))
        "w1": 0.2 * jax.random.normal(k_w1, (E + 1, E), dtype=jnp.float32),
        "b1": 0.1 * jax.random.normal(k_b1, (1, E), dtype=jnp.float32),
        # LorentzHypLinear 2: (E+1) -> O
        "w2": 0.2 * jax.random.normal(k_w2, (E + 1, O), dtype=jnp.float32),
        "b2": 0.1 * jax.random.normal(k_b2, (1, O), dtype=jnp.float32),
        # nn.Linear(1, 1): [weight, bias]  (flat 1-D -> SMEM)
        "lin": jax.random.normal(k_lin, (2,), dtype=jnp.float32),
    }

    adj = jax.block_until_ready(adj_decoder(z, params))
    ref = adj_decoder_ref(z, params)
    assert adj.shape == (N, N)

    err = jnp.abs(adj - ref)
    # Off-diagonal entries are well-conditioned -> tight agreement expected.
    off_diag = ~jnp.eye(N, dtype=bool)
    tol = 2e-4 + 1e-3 * jnp.abs(ref)
    assert bool(jnp.all(jnp.where(off_diag, err <= tol, True))), (
        f"off-diagonal max abs err {jnp.max(jnp.where(off_diag, err, 0.0))}")
    # Diagonal entries are self-distances: u = -<x,x>_L/K ~= 1 sits at arccosh's branch
    # point (derivative -> inf), so independent f32 rounding in the kernel vs the XLA
    # reference is amplified there; real bugs would still show up as O(0.1) errors.
    assert bool(jnp.all(err <= 5e-3)), f"max abs err {jnp.max(err)}"

    print("KERNEL_OK")
</pallas_src>

<mosaic_0001>
module attributes {stable_mosaic.version = 11 : i64} {
  func.func @node_feat_kernel(%arg0: i32, %arg1: memref<128x16xf32, #tpu.memory_space<vmem>>, %arg2: memref<1x16xf32, #tpu.memory_space<vmem>>, %arg3: memref<1x16xf32, #tpu.memory_space<vmem>>, %arg4: memref<1x16xf32, #tpu.memory_space<vmem>>, %arg5: memref<16x16xf32, #tpu.memory_space<vmem>>, %arg6: memref<1x16xf32, #tpu.memory_space<vmem>>, %arg7: memref<1x16xf32, #tpu.memory_space<vmem>>, %arg8: memref<1x16xf32, #tpu.memory_space<vmem>>, %arg9: memref<1x8xf32, #tpu.memory_space<vmem>>, %arg10: memref<16x8xf32, #tpu.memory_space<vmem>>, %arg11: memref<1x8xf32, #tpu.memory_space<vmem>>, %arg12: memref<128x9xf32, #tpu.memory_space<vmem>>, %arg13: memref<9x128xf32, #tpu.memory_space<vmem>>) attributes {dimension_semantics = [#tpu.dimension_semantics<parallel>], iteration_bounds = array<i64: 1>, scalar_prefetch = 0 : i64, scratch_operands = 0 : i64, tpu.core_type = #tpu.core_type<tc>, window_params = [{transform_indices = @transform_0, window_bounds = array<i64: 128, 16>}, {pipeline_mode = #tpu.pipeline_mode<synchronous>, transform_indices = @transform_1, window_bounds = array<i64: 1, 16>}, {pipeline_mode = #tpu.pipeline_mode<synchronous>, transform_indices = @transform_2, window_bounds = array<i64: 1, 16>}, {pipeline_mode = #tpu.pipeline_mode<synchronous>, transform_indices = @transform_3, window_bounds = array<i64: 1, 16>}, {pipeline_mode = #tpu.pipeline_mode<synchronous>, transform_indices = @transform_4, window_bounds = array<i64: 16, 16>}, {pipeline_mode = #tpu.pipeline_mode<synchronous>, transform_indices = @transform_5, window_bounds = array<i64: 1, 16>}, {pipeline_mode = #tpu.pipeline_mode<synchronous>, transform_indices = @transform_6, window_bounds = array<i64: 1, 16>}, {pipeline_mode = #tpu.pipeline_mode<synchronous>, transform_indices = @transform_7, window_bounds = array<i64: 1, 16>}, {pipeline_mode = #tpu.pipeline_mode<synchronous>, transform_indices = @transform_8, window_bounds = array<i64: 1, 8>}, {pipeline_mode = #tpu.pipeline_mode<synchronous>, transform_indices = @transform_9, window_bounds = array<i64: 16, 8>}, {pipeline_mode = #tpu.pipeline_mode<synchronous>, transform_indices = @transform_10, window_bounds = array<i64: 1, 8>}, {transform_indices = @transform_11, window_bounds = array<i64: 128, 9>}, {transform_indices = @transform_12, window_bounds = array<i64: 9, 128>}]} {
    %c0 = arith.constant 0 : index
    %c0_0 = arith.constant 0 : index
    %0 = vector.load %arg1[%c0, %c0_0] : memref<128x16xf32, #tpu.memory_space<vmem>>, vector<128x16xf32>
    %cst = arith.constant dense<0.000000e+00> : vector<128xf32>
    %1 = vector.multi_reduction <add>, %0, %cst [1] : vector<128x16xf32> to vector<128xf32>
    %2 = vector.shape_cast %1 : vector<128xf32> to vector<128x1xf32>
    %cst_1 = arith.constant 1.600000e+01 : f32
    %3 = vector.broadcast %cst_1 : f32 to vector<128x1xf32>
    %4 = arith.divf %2, %3 : vector<128x1xf32>
    %5 = vector.broadcast %4 : vector<128x1xf32> to vector<128x16xf32>
    %6 = arith.subf %0, %5 : vector<128x16xf32>
    %7 = arith.mulf %6, %6 : vector<128x16xf32>
    %cst_2 = arith.constant dense<0.000000e+00> : vector<128xf32>
    %8 = vector.multi_reduction <add>, %7, %cst_2 [1] : vector<128x16xf32> to vector<128xf32>
    %9 = vector.shape_cast %8 : vector<128xf32> to vector<128x1xf32>
    %cst_3 = arith.constant 1.600000e+01 : f32
    %10 = vector.broadcast %cst_3 : f32 to vector<128x1xf32>
    %11 = arith.divf %9, %10 : vector<128x1xf32>
    %12 = vector.broadcast %4 : vector<128x1xf32> to vector<128x16xf32>
    %13 = arith.subf %0, %12 : vector<128x16xf32>
    %cst_4 = arith.constant 9.99999974E-6 : f32
    %14 = vector.broadcast %cst_4 : f32 to vector<128x1xf32>
    %15 = arith.addf %11, %14 : vector<128x1xf32>
    %16 = math.rsqrt %15 : vector<128x1xf32>
    %17 = vector.broadcast %16 : vector<128x1xf32> to vector<128x16xf32>
    %18 = arith.mulf %13, %17 : vector<128x16xf32>
    %c0_5 = arith.constant 0 : index
    %c0_6 = arith.constant 0 : index
    %19 = vector.load %arg2[%c0_5, %c0_6] : memref<1x16xf32, #tpu.memory_space<vmem>>, vector<1x16xf32>
    %20 = vector.broadcast %19 : vector<1x16xf32> to vector<128x16xf32>
    %21 = arith.mulf %18, %20 : vector<128x16xf32>
    %c0_7 = arith.constant 0 : index
    %c0_8 = arith.constant 0 : index
    %22 = vector.load %arg3[%c0_7, %c0_8] : memref<1x16xf32, #tpu.memory_space<vmem>>, vector<1x16xf32>
    %23 = vector.broadcast %22 : vector<1x16xf32> to vector<128x16xf32>
    %24 = arith.addf %21, %23 : vector<128x16xf32>
    %25 = arith.mulf %24, %24 : vector<128x16xf32>
    %cst_9 = arith.constant dense<0.000000e+00> : vector<128xf32>
    %26 = vector.multi_reduction <add>, %25, %cst_9 [1] : vector<128x16xf32> to vector<128xf32>
    %27 = vector.shape_cast %26 : vector<128xf32> to vector<128x1xf32>
    %cst_10 = arith.constant 1.000000e+00 : f32
    %28 = vector.broadcast %cst_10 : f32 to vector<128x1xf32>
    %29 = arith.addf %27, %28 : vector<128x1xf32>
    %30 = math.sqrt %29 : vector<128x1xf32>
    %c0_11 = arith.constant 0 : index
    %c0_12 = arith.constant 0 : index
    %31 = vector.load %arg4[%c0_11, %c0_12] : memref<1x16xf32, #tpu.memory_space<vmem>>, vector<1x16xf32>
    %32 = vector.broadcast %30 : vector<128x1xf32> to vector<128x16xf32>
    %33 = vector.broadcast %31 : vector<1x16xf32> to vector<128x16xf32>
    %34 = arith.mulf %32, %33 : vector<128x16xf32>
    %c0_13 = arith.constant 0 : index
    %c0_14 = arith.constant 0 : index
    %35 = vector.load %arg5[%c0_13, %c0_14] : memref<16x16xf32, #tpu.memory_space<vmem>>, vector<16x16xf32>
    %cst_15 = arith.constant dense<0.000000e+00> : vector<128x16xf32>
    %36 = tpu.matmul %24, %35, %cst_15 {dimension_numbers = #tpu.dot_dimension_numbers<[1], [0], [0], [1], [0, 0, 1, 1], [], []>} : vector<128x16xf32>, vector<16x16xf32>, vector<128x16xf32> -> vector<128x16xf32>
    %37 = arith.addf %34, %36 : vector<128x16xf32>
    %c0_16 = arith.constant 0 : index
    %c0_17 = arith.constant 0 : index
    %38 = vector.load %arg6[%c0_16, %c0_17] : memref<1x16xf32, #tpu.memory_space<vmem>>, vector<1x16xf32>
    %39 = vector.broadcast %38 : vector<1x16xf32> to vector<128x16xf32>
    %40 = arith.addf %37, %39 : vector<128x16xf32>
    %41 = arith.addf %40, %0 : vector<128x16xf32>
    %cst_18 = arith.constant 0.000000e+00 : f32
    %42 = vector.broadcast %cst_18 : f32 to vector<128x16xf32>
    %43 = arith.maximumf %41, %42 : vector<128x16xf32>
    %cst_19 = arith.constant dense<0.000000e+00> : vector<128xf32>
    %44 = vector.multi_reduction <add>, %43, %cst_19 [1] : vector<128x16xf32> to vector<128xf32>
    %45 = vector.shape_cast %44 : vector<128xf32> to vector<128x1xf32>
    %cst_20 = arith.constant 1.600000e+01 : f32
    %46 = vector.broadcast %cst_20 : f32 to vector<128x1xf32>
    %47 = arith.divf %45, %46 : vector<128x1xf32>
    %48 = vector.broadcast %47 : vector<128x1xf32> to vector<128x16xf32>
    %49 = arith.subf %43, %48 : vector<128x16xf32>
    %50 = arith.mulf %49, %49 : vector<128x16xf32>
    %cst_21 = arith.constant dense<0.000000e+00> : vector<128xf32>
    %51 = vector.multi_reduction <add>, %50, %cst_21 [1] : vector<128x16xf32> to vector<128xf32>
    %52 = vector.shape_cast %51 : vector<128xf32> to vector<128x1xf32>
    %cst_22 = arith.constant 1.600000e+01 : f32
    %53 = vector.broadcast %cst_22 : f32 to vector<128x1xf32>
    %54 = arith.divf %52, %53 : vector<128x1xf32>
    %55 = vector.broadcast %47 : vector<128x1xf32> to vector<128x16xf32>
    %56 = arith.subf %43, %55 : vector<128x16xf32>
    %cst_23 = arith.constant 9.99999974E-6 : f32
    %57 = vector.broadcast %cst_23 : f32 to vector<128x1xf32>
    %58 = arith.addf %54, %57 : vector<128x1xf32>
    %59 = math.rsqrt %58 : vector<128x1xf32>
    %60 = vector.broadcast %59 : vector<128x1xf32> to vector<128x16xf32>
    %61 = arith.mulf %56, %60 : vector<128x16xf32>
    %c0_24 = arith.constant 0 : index
    %c0_25 = arith.constant 0 : index
    %62 = vector.load %arg7[%c0_24, %c0_25] : memref<1x16xf32, #tpu.memory_space<vmem>>, vector<1x16xf32>
    %63 = vector.broadcast %62 : vector<1x16xf32> to vector<128x16xf32>
    %64 = arith.mulf %61, %63 : vector<128x16xf32>
    %c0_26 = arith.constant 0 : index
    %c0_27 = arith.constant 0 : index
    %65 = vector.load %arg8[%c0_26, %c0_27] : memref<1x16xf32, #tpu.memory_space<vmem>>, vector<1x16xf32>
    %66 = vector.broadcast %65 : vector<1x16xf32> to vector<128x16xf32>
    %67 = arith.addf %64, %66 : vector<128x16xf32>
    %68 = arith.mulf %67, %67 : vector<128x16xf32>
    %cst_28 = arith.constant dense<0.000000e+00> : vector<128xf32>
    %69 = vector.multi_reduction <add>, %68, %cst_28 [1] : vector<128x16xf32> to vector<128xf32>
    %70 = vector.shape_cast %69 : vector<128xf32> to vector<128x1xf32>
    %cst_29 = arith.constant 1.000000e+00 : f32
    %71 = vector.broadcast %cst_29 : f32 to vector<128x1xf32>
    %72 = arith.addf %70, %71 : vector<128x1xf32>
    %73 = math.sqrt %72 : vector<128x1xf32>
    %c0_30 = arith.constant 0 : index
    %c0_31 = arith.constant 0 : index
    %74 = vector.load %arg9[%c0_30, %c0_31] : memref<1x8xf32, #tpu.memory_space<vmem>>, vector<1x8xf32>
    %75 = vector.broadcast %73 : vector<128x1xf32> to vector<128x8xf32>
    %76 = vector.broadcast %74 : vector<1x8xf32> to vector<128x8xf32>
    %77 = arith.mulf %75, %76 : vector<128x8xf32>
    %c0_32 = arith.constant 0 : index
    %c0_33 = arith.constant 0 : index
    %78 = vector.load %arg10[%c0_32, %c0_33] : memref<16x8xf32, #tpu.memory_space<vmem>>, vector<16x8xf32>
    %cst_34 = arith.constant dense<0.000000e+00> : vector<128x8xf32>
    %79 = tpu.matmul %67, %78, %cst_34 {dimension_numbers = #tpu.dot_dimension_numbers<[1], [0], [0], [1], [0, 0, 1, 1], [], []>} : vector<128x16xf32>, vector<16x8xf32>, vector<128x8xf32> -> vector<128x8xf32>
    %80 = arith.addf %77, %79 : vector<128x8xf32>
    %c0_35 = arith.constant 0 : index
    %c0_36 = arith.constant 0 : index
    %81 = vector.load %arg11[%c0_35, %c0_36] : memref<1x8xf32, #tpu.memory_space<vmem>>, vector<1x8xf32>
    %82 = vector.broadcast %81 : vector<1x8xf32> to vector<128x8xf32>
    %83 = arith.addf %80, %82 : vector<128x8xf32>
    %84 = arith.mulf %83, %83 : vector<128x8xf32>
    %cst_37 = arith.constant dense<0.000000e+00> : vector<128xf32>
    %85 = vector.multi_reduction <add>, %84, %cst_37 [1] : vector<128x8xf32> to vector<128xf32>
    %86 = vector.shape_cast %85 : vector<128xf32> to vector<128x1xf32>
    %cst_38 = arith.constant 1.000000e+00 : f32
    %87 = vector.broadcast %cst_38 : f32 to vector<128x1xf32>
    %88 = arith.addf %86, %87 : vector<128x1xf32>
    %89 = math.sqrt %88 : vector<128x1xf32>
    %c0_39 = arith.constant 0 : index
    %c0_40 = arith.constant 0 : index
    %90 = vector.load %arg12[%c0_39, %c0_40] : memref<128x9xf32, #tpu.memory_space<vmem>>, vector<128x8xf32>
    tpu.vector_store %arg12[%c0_39, %c0_40], %83 {strides = array<i32>} : memref<128x9xf32, #tpu.memory_space<vmem>>, vector<128x8xf32>,
    %c0_41 = arith.constant 0 : index
    %c8 = arith.constant 8 : index
    %91 = vector.load %arg12[%c0_41, %c8] : memref<128x9xf32, #tpu.memory_space<vmem>>, vector<128x1xf32>
    tpu.vector_store %arg12[%c0_41, %c8], %89 {strides = array<i32>} : memref<128x9xf32, #tpu.memory_space<vmem>>, vector<128x1xf32>,
    %92 = tpu.transpose %83, [1, 0] : vector<128x8xf32> -> vector<8x128xf32>
    %cst_42 = arith.constant 0.000000e+00 : f32
    %93 = vector.broadcast %cst_42 : f32 to vector<8x128xf32>
    %94 = arith.subf %93, %92 : vector<8x128xf32>
    %c0_43 = arith.constant 0 : index
    %c0_44 = arith.constant 0 : index
    %95 = vector.load %arg13[%c0_43, %c0_44] : memref<9x128xf32, #tpu.memory_space<vmem>>, vector<8x128xf32>
    tpu.vector_store %arg13[%c0_43, %c0_44], %94 {strides = array<i32>} : memref<9x128xf32, #tpu.memory_space<vmem>>, vector<8x128xf32>,
    %96 = arith.mulf %92, %92 : vector<8x128xf32>
    %cst_45 = arith.constant dense<0.000000e+00> : vector<128xf32>
    %97 = vector.multi_reduction <add>, %96, %cst_45 [0] : vector<8x128xf32> to vector<128xf32>
    %98 = vector.shape_cast %97 : vector<128xf32> to vector<1x128xf32>
    %cst_46 = arith.constant 1.000000e+00 : f32
    %99 = vector.broadcast %cst_46 : f32 to vector<1x128xf32>
    %100 = arith.addf %98, %99 : vector<1x128xf32>
    %101 = math.sqrt %100 : vector<1x128xf32>
    %c8_47 = arith.constant 8 : index
    %c0_48 = arith.constant 0 : index
    %102 = vector.load %arg13[%c8_47, %c0_48] : memref<9x128xf32, #tpu.memory_space<vmem>>, vector<1x128xf32>
    tpu.vector_store %arg13[%c8_47, %c0_48], %101 {strides = array<i32>} : memref<9x128xf32, #tpu.memory_space<vmem>>, vector<1x128xf32>,
    return
  }
  func.func @transform_0(%arg0: i32) -> (i32, i32) {
    %c0_i32 = arith.constant 0 : i32
    %c0_i32_0 = arith.constant 0 : i32
    return %arg0, %c0_i32 : i32, i32
  }
  func.func @transform_1(%arg0: i32) -> (i32, i32) {
    %c0_i32 = arith.constant 0 : i32
    %c0_i32_0 = arith.constant 0 : i32
    %c0_i32_1 = arith.constant 0 : i32
    return %c0_i32, %c0_i32_0 : i32, i32
  }
  func.func @transform_2(%arg0: i32) -> (i32, i32) {
    %c0_i32 = arith.constant 0 : i32
    %c0_i32_0 = arith.constant 0 : i32
    %c0_i32_1 = arith.constant 0 : i32
    return %c0_i32, %c0_i32_0 : i32, i32
  }
  func.func @transform_3(%arg0: i32) -> (i32, i32) {
    %c0_i32 = arith.constant 0 : i32
    %c0_i32_0 = arith.constant 0 : i32
    %c0_i32_1 = arith.constant 0 : i32
    return %c0_i32, %c0_i32_0 : i32, i32
  }
  func.func @transform_4(%arg0: i32) -> (i32, i32) {
    %c0_i32 = arith.constant 0 : i32
    %c0_i32_0 = arith.constant 0 : i32
    %c0_i32_1 = arith.constant 0 : i32
    return %c0_i32, %c0_i32_0 : i32, i32
  }
  func.func @transform_5(%arg0: i32) -> (i32, i32) {
    %c0_i32 = arith.constant 0 : i32
    %c0_i32_0 = arith.constant 0 : i32
    %c0_i32_1 = arith.constant 0 : i32
    return %c0_i32, %c0_i32_0 : i32, i32
  }
  func.func @transform_6(%arg0: i32) -> (i32, i32) {
    %c0_i32 = arith.constant 0 : i32
    %c0_i32_0 = arith.constant 0 : i32
    %c0_i32_1 = arith.constant 0 : i32
    return %c0_i32, %c0_i32_0 : i32, i32
  }
  func.func @transform_7(%arg0: i32) -> (i32, i32) {
    %c0_i32 = arith.constant 0 : i32
    %c0_i32_0 = arith.constant 0 : i32
    %c0_i32_1 = arith.constant 0 : i32
    return %c0_i32, %c0_i32_0 : i32, i32
  }
  func.func @transform_8(%arg0: i32) -> (i32, i32) {
    %c0_i32 = arith.constant 0 : i32
    %c0_i32_0 = arith.constant 0 : i32
    %c0_i32_1 = arith.constant 0 : i32
    return %c0_i32, %c0_i32_0 : i32, i32
  }
  func.func @transform_9(%arg0: i32) -> (i32, i32) {
    %c0_i32 = arith.constant 0 : i32
    %c0_i32_0 = arith.constant 0 : i32
    %c0_i32_1 = arith.constant 0 : i32
    return %c0_i32, %c0_i32_0 : i32, i32
  }
  func.func @transform_10(%arg0: i32) -> (i32, i32) {
    %c0_i32 = arith.constant 0 : i32
    %c0_i32_0 = arith.constant 0 : i32
    %c0_i32_1 = arith.constant 0 : i32
    return %c0_i32, %c0_i32_0 : i32, i32
  }
  func.func @transform_11(%arg0: i32) -> (i32, i32) {
    %c0_i32 = arith.constant 0 : i32
    %c0_i32_0 = arith.constant 0 : i32
    return %arg0, %c0_i32 : i32, i32
  }
  func.func @transform_12(%arg0: i32) -> (i32, i32) {
    %c0_i32 = arith.constant 0 : i32
    %c0_i32_0 = arith.constant 0 : i32
    return %c0_i32, %arg0 : i32, i32
  }
}

</mosaic_0001>

<llo_original>
// kernel: tpu_custom_call.1
$region0: #{tpu_custom_call.1}
  #allocation0 [shape = 'u32[]', space=smem, size = 0x4, offset = 0x4, fixed_abs, tag = 'smem constant byte address 0x4 - core index']
  #allocation1 [shape = 'u32[144,128]{1,0:T(1,128)}', space=vmem, size = 0x12000, scoped, tag = 'internal scratch']
  %s0 = inlined_call_operand.vmem [shape: f32[128,16], index: 0, kind: input, shape index: {}]
  %s1 = inlined_call_operand.vmem [shape: f32[1,16], index: 1, kind: input, shape index: {}]
  %s2 = inlined_call_operand.vmem [shape: f32[1,16], index: 2, kind: input, shape index: {}]
  %s3 = inlined_call_operand.vmem [shape: f32[1,16], index: 3, kind: input, shape index: {}]
  %s4 = inlined_call_operand.vmem [shape: f32[16,16], index: 4, kind: input, shape index: {}]
  %s5 = inlined_call_operand.vmem [shape: f32[1,16], index: 5, kind: input, shape index: {}]
  %s6 = inlined_call_operand.vmem [shape: f32[1,16], index: 6, kind: input, shape index: {}]
  %s7 = inlined_call_operand.vmem [shape: f32[1,16], index: 7, kind: input, shape index: {}]
  %s8 = inlined_call_operand.vmem [shape: f32[1,8], index: 8, kind: input, shape index: {}]
  %s9 = inlined_call_operand.vmem [shape: f32[16,8], index: 9, kind: input, shape index: {}]
  %s10 = inlined_call_operand.vmem [shape: f32[1,8], index: 10, kind: input, shape index: {}]
  %s11 = inlined_call_operand.vmem [shape: f32[128,9], index: 11, kind: output, shape index: {0}]
  %s12 = inlined_call_operand.hbm [shape: f32[9,128], index: 12, kind: output, shape index: {1}]
  %13 = xla_tuple %s11, %s12
  %s14 = sld [smem:[#allocation0]]
  $region62: #{tpu_custom_call.1} parent=0
    _
  %s16 = ssub.s32 1, %s14
  %s17 = scalar_select 0, %s16, %s14
  $region1: #{tpu_custom_call.1} parent=0
    #allocation2 [shape = 'u8[8192]{0}', space=vmem, size = 0x2000, scoped, tag = 'output window, operand 1, single buffered']
    #allocation3 [shape = 's32[1]{0}', space=sflag, size = 0x4, scoped, tag = 'scoped memory for tpu_custom_call.1']
    %18 = vsyncpa [#allocation3], 0
    // Predicated region
    $region2: #{tpu_custom_call.1} parent=1 // pred_check
      _
    $region3: #{tpu_custom_call.1} parent=1 // pred_check_branch
      %20 = sbr.rel (0) target = $region5
    $region4: #{tpu_custom_call.1} parent=1 // pred_region
      _
    $region5: #{tpu_custom_call.1} parent=1 // pred_fallthru
      _
    // Predicated region
    $region6: #{tpu_custom_call.1} parent=1 // pred_check
      _
    $region7: #{tpu_custom_call.1} parent=1 // pred_check_branch
      %22 = sbr.rel (0) target = $region9
    $region8: #{tpu_custom_call.1} parent=1 // pred_region
      _
    $region9: #{tpu_custom_call.1} parent=1 // pred_fallthru
      _
    // Predicated region
    $region10: #{tpu_custom_call.1} parent=1 // pred_check
      _
    $region11: #{tpu_custom_call.1} parent=1 // pred_check_branch
      %24 = sbr.rel (0) target = $region13
    $region12: #{tpu_custom_call.1} parent=1 // pred_region
      _
    $region13: #{tpu_custom_call.1} parent=1 // pred_fallthru
      _
    // Predicated region
    $region14: #{tpu_custom_call.1} parent=1 // pred_check
      _
    $region15: #{tpu_custom_call.1} parent=1 // pred_check_branch
      %26 = sbr.rel (0) target = $region17
    $region16: #{tpu_custom_call.1} parent=1 // pred_region
      _
    $region17: #{tpu_custom_call.1} parent=1 // pred_fallthru
      _
    // Predicated region
    $region18: #{tpu_custom_call.1} parent=1 // pred_check
      _
    $region19: #{tpu_custom_call.1} parent=1 // pred_check_branch
      %28 = sbr.rel (0) target = $region21
    $region20: #{tpu_custom_call.1} parent=1 // pred_region
      _
    $region21: #{tpu_custom_call.1} parent=1 // pred_fallthru
      _
    // Predicated region
    $region22: #{tpu_custom_call.1} parent=1 // pred_check
      _
    $region23: #{tpu_custom_call.1} parent=1 // pred_check_branch
      %30 = sbr.rel (0) target = $region25
    $region24: #{tpu_custom_call.1} parent=1 // pred_region
      _
    $region25: #{tpu_custom_call.1} parent=1 // pred_fallthru
      _
    // Predicated region
    $region26: #{tpu_custom_call.1} parent=1 // pred_check
      _
    $region27: #{tpu_custom_call.1} parent=1 // pred_check_branch
      %32 = sbr.rel (0) target = $region29
    $region28: #{tpu_custom_call.1} parent=1 // pred_region
      _
    $region29: #{tpu_custom_call.1} parent=1 // pred_fallthru
      _
    // Predicated region
    $region30: #{tpu_custom_call.1} parent=1 // pred_check
      _
    $region31: #{tpu_custom_call.1} parent=1 // pred_check_branch
      %34 = sbr.rel (0) target = $region33
    $region32: #{tpu_custom_call.1} parent=1 // pred_region
      _
    $region33: #{tpu_custom_call.1} parent=1 // pred_fallthru
      _
    // Predicated region
    $region34: #{tpu_custom_call.1} parent=1 // pred_check
      _
    $region35: #{tpu_custom_call.1} parent=1 // pred_check_branch
      %36 = sbr.rel (0) target = $region37
    $region36: #{tpu_custom_call.1} parent=1 // pred_region
      _
    $region37: #{tpu_custom_call.1} parent=1 // pred_fallthru
      _
    // Predicated region
    $region38: #{tpu_custom_call.1} parent=1 // pred_check
      _
    $region39: #{tpu_custom_call.1} parent=1 // pred_check_branch
      %38 = sbr.rel (0) target = $region41
    $region40: #{tpu_custom_call.1} parent=1 // pred_region
      _
    $region41: #{tpu_custom_call.1} parent=1 // pred_fallthru
      _
    // Predicated region
    $region42: #{tpu_custom_call.1} parent=1 // pred_check
      _
    $region43: #{tpu_custom_call.1} parent=1 // pred_check_branch
      %40 = sbr.rel (0) target = $region45
    $region44: #{tpu_custom_call.1} parent=1 // pred_region
      _
    $region45: #{tpu_custom_call.1} parent=1 // pred_fallthru
      _
    %v41 = vld [vmem:[%s0] sm:$0xff]
    %v42 = vld [vmem:[%s0 + $0x8] sm:$0xff]
    %v43 = vld [vmem:[%s0 + $0x10] sm:$0xff]
    %v44 = vld [vmem:[%s0 + $0x18] sm:$0xff]
    %v45 = vld [vmem:[%s0 + $0x20] sm:$0xff]
    %v46 = vld [vmem:[%s0 + $0x28] sm:$0xff]
    %v47 = vld [vmem:[%s0 + $0x30] sm:$0xff]
    %v48 = vld [vmem:[%s0 + $0x38] sm:$0xff]
    %v49 = vld [vmem:[%s0 + $0x40] sm:$0xff]
    %v50 = vld [vmem:[%s0 + $0x48] sm:$0xff]
    %v51 = vld [vmem:[%s0 + $0x50] sm:$0xff]
    %v52 = vld [vmem:[%s0 + $0x58] sm:$0xff]
    %v53 = vld [vmem:[%s0 + $0x60] sm:$0xff]
    %v54 = vld [vmem:[%s0 + $0x68] sm:$0xff]
    %v55 = vld [vmem:[%s0 + $0x70] sm:$0xff]
    %v56 = vld [vmem:[%s0 + $0x78] sm:$0xff]
    %vm57 = vcmask 130048
    %v58 = vsel %vm57, %v41, 0.0
    %59 = vadd.xlane.f32.xlu0 %v58
    %v60 = vpop.xlane.xlu0 %59
    %v61 = vsel %vm57, %v42, 0.0
    %62 = vadd.xlane.f32.xlu0 %v61
    %v63 = vpop.xlane.xlu0 %62
    %v64 = vsel %vm57, %v43, 0.0
    %65 = vadd.xlane.f32.xlu0 %v64
    %v66 = vpop.xlane.xlu0 %65
    %v67 = vsel %vm57, %v44, 0.0
    %68 = vadd.xlane.f32.xlu0 %v67
    %v69 = vpop.xlane.xlu0 %68
    %v70 = vsel %vm57, %v45, 0.0
    %71 = vadd.xlane.f32.xlu0 %v70
    %v72 = vpop.xlane.xlu0 %71
    %v73 = vsel %vm57, %v46, 0.0
    %74 = vadd.xlane.f32.xlu0 %v73
    %v75 = vpop.xlane.xlu0 %74
    %v76 = vsel %vm57, %v47, 0.0
    %77 = vadd.xlane.f32.xlu0 %v76
    %v78 = vpop.xlane.xlu0 %77
    %v79 = vsel %vm57, %v48, 0.0
    %80 = vadd.xlane.f32.xlu0 %v79
    %v81 = vpop.xlane.xlu0 %80
    %v82 = vsel %vm57, %v49, 0.0
    %83 = vadd.xlane.f32.xlu0 %v82
    %v84 = vpop.xlane.xlu0 %83
    %v85 = vsel %vm57, %v50, 0.0
    %86 = vadd.xlane.f32.xlu0 %v85
    %v87 = vpop.xlane.xlu0 %86
    %v88 = vsel %vm57, %v51, 0.0
    %89 = vadd.xlane.f32.xlu0 %v88
    %v90 = vpop.xlane.xlu0 %89
    %v91 = vsel %vm57, %v52, 0.0
    %92 = vadd.xlane.f32.xlu0 %v91
    %v93 = vpop.xlane.xlu0 %92
    %v94 = vsel %vm57, %v53, 0.0
    %95 = vadd.xlane.f32.xlu0 %v94
    %v96 = vpop.xlane.xlu0 %95
    %v97 = vsel %vm57, %v54, 0.0
    %98 = vadd.xlane.f32.xlu0 %v97
    %v99 = vpop.xlane.xlu0 %98
    %v100 = vsel %vm57, %v55, 0.0
    %101 = vadd.xlane.f32.xlu0 %v100
    %v102 = vpop.xlane.xlu0 %101
    %v103 = vsel %vm57, %v56, 0.0
    %104 = vadd.xlane.f32.xlu0 %v103
    %v105 = vpop.xlane.xlu0 %104
    %v106 = vrcp.pop 16.0
    %v107 = vmul.f32 %v60, %v106
    %v108 = vmul.f32 %v63, %v106
    %v109 = vmul.f32 %v66, %v106
    %v110 = vmul.f32 %v69, %v106
    %v111 = vmul.f32 %v72, %v106
    %v112 = vmul.f32 %v75, %v106
    %v113 = vmul.f32 %v78, %v106
    %v114 = vmul.f32 %v81, %v106
    %v115 = vmul.f32 %v84, %v106
    %v116 = vmul.f32 %v87, %v106
    %v117 = vmul.f32 %v90, %v106
    %v118 = vmul.f32 %v93, %v106
    %v119 = vmul.f32 %v96, %v106
    %v120 = vmul.f32 %v99, %v106
    %v121 = vmul.f32 %v102, %v106
    %v122 = vmul.f32 %v105, %v106
    %v123 = vsub.f32 %v41, %v107
    %v124 = vsub.f32 %v42, %v108
    %v125 = vsub.f32 %v43, %v109
    %v126 = vsub.f32 %v44, %v110
    %v127 = vsub.f32 %v45, %v111
    %v128 = vsub.f32 %v46, %v112
    %v129 = vsub.f32 %v47, %v113
    %v130 = vsub.f32 %v48, %v114
    %v131 = vsub.f32 %v49, %v115
    %v132 = vsub.f32 %v50, %v116
    %v133 = vsub.f32 %v51, %v117
    %v134 = vsub.f32 %v52, %v118
    %v135 = vsub.f32 %v53, %v119
    %v136 = vsub.f32 %v54, %v120
    %v137 = vsub.f32 %v55, %v121
    %v138 = vsub.f32 %v56, %v122
    %v139 = vmul.f32 %v123, %v123
    %v140 = vmul.f32 %v124, %v124
    %v141 = vmul.f32 %v125, %v125
    %v142 = vmul.f32 %v126, %v126
    %v143 = vmul.f32 %v127, %v127
    %v144 = vmul.f32 %v128, %v128
    %v145 = vmul.f32 %v129, %v129
    %v146 = vmul.f32 %v130, %v130
    %v147 = vmul.f32 %v131, %v131
    %v148 = vmul.f32 %v132, %v132
    %v149 = vmul.f32 %v133, %v133
    %v150 = vmul.f32 %v134, %v134
    %v151 = vmul.f32 %v135, %v135
    %v152 = vmul.f32 %v136, %v136
    %v153 = vmul.f32 %v137, %v137
    %v154 = vmul.f32 %v138, %v138
    %v155 = vsel %vm57, %v139, 0.0
    %156 = vadd.xlane.f32.xlu0 %v155
    %v157 = vpop.xlane.xlu0 %156
    %v158 = vsel %vm57, %v140, 0.0
    %159 = vadd.xlane.f32.xlu0 %v158
    %v160 = vpop.xlane.xlu0 %159
    %v161 = vsel %vm57, %v141, 0.0
    %162 = vadd.xlane.f32.xlu0 %v161
    %v163 = vpop.xlane.xlu0 %162
    %v164 = vsel %vm57, %v142, 0.0
    %165 = vadd.xlane.f32.xlu0 %v164
    %v166 = vpop.xlane.xlu0 %165
    %v167 = vsel %vm57, %v143, 0.0
    %168 = vadd.xlane.f32.xlu0 %v167
    %v169 = vpop.xlane.xlu0 %168
    %v170 = vsel %vm57, %v144, 0.0
    %171 = vadd.xlane.f32.xlu0 %v170
    %v172 = vpop.xlane.xlu0 %171
    %v173 = vsel %vm57, %v145, 0.0
    %174 = vadd.xlane.f32.xlu0 %v173
    %v175 = vpop.xlane.xlu0 %174
    %v176 = vsel %vm57, %v146, 0.0
    %177 = vadd.xlane.f32.xlu0 %v176
    %v178 = vpop.xlane.xlu0 %177
    %v179 = vsel %vm57, %v147, 0.0
    %180 = vadd.xlane.f32.xlu0 %v179
    %v181 = vpop.xlane.xlu0 %180
    %v182 = vsel %vm57, %v148, 0.0
    %183 = vadd.xlane.f32.xlu0 %v182
    %v184 = vpop.xlane.xlu0 %183
    %v185 = vsel %vm57, %v149, 0.0
    %186 = vadd.xlane.f32.xlu0 %v185
    %v187 = vpop.xlane.xlu0 %186
    %v188 = vsel %vm57, %v150, 0.0
    %189 = vadd.xlane.f32.xlu0 %v188
    %v190 = vpop.xlane.xlu0 %189
    %v191 = vsel %vm57, %v151, 0.0
    %192 = vadd.xlane.f32.xlu0 %v191
    %v193 = vpop.xlane.xlu0 %192
    %v194 = vsel %vm57, %v152, 0.0
    %195 = vadd.xlane.f32.xlu0 %v194
    %v196 = vpop.xlane.xlu0 %195
    %v197 = vsel %vm57, %v153, 0.0
    %198 = vadd.xlane.f32.xlu0 %v197
    %v199 = vpop.xlane.xlu0 %198
    %v200 = vsel %vm57, %v154, 0.0
    %201 = vadd.xlane.f32.xlu0 %v200
    %v202 = vpop.xlane.xlu0 %201
    %v203 = vmul.f32 %v157, %v106
    %v204 = vmul.f32 %v160, %v106
    %v205 = vmul.f32 %v163, %v106
    %v206 = vmul.f32 %v166, %v106
    %v207 = vmul.f32 %v169, %v106
    %v208 = vmul.f32 %v172, %v106
    %v209 = vmul.f32 %v175, %v106
    %v210 = vmul.f32 %v178, %v106
    %v211 = vmul.f32 %v181, %v106
    %v212 = vmul.f32 %v184, %v106
    %v213 = vmul.f32 %v187, %v106
    %v214 = vmul.f32 %v190, %v106
    %v215 = vmul.f32 %v193, %v106
    %v216 = vmul.f32 %v196, %v106
    %v217 = vmul.f32 %v199, %v106
    %v218 = vmul.f32 %v202, %v106
    %v219 = vadd.f32 %v203, 1e-05
    %v220 = vadd.f32 %v204, 1e-05
    %v221 = vadd.f32 %v205, 1e-05
    %v222 = vadd.f32 %v206, 1e-05
    %v223 = vadd.f32 %v207, 1e-05
    %v224 = vadd.f32 %v208, 1e-05
    %v225 = vadd.f32 %v209, 1e-05
    %v226 = vadd.f32 %v210, 1e-05
    %v227 = vadd.f32 %v211, 1e-05
    %v228 = vadd.f32 %v212, 1e-05
    %v229 = vadd.f32 %v213, 1e-05
    %v230 = vadd.f32 %v214, 1e-05
    %v231 = vadd.f32 %v215, 1e-05
    %v232 = vadd.f32 %v216, 1e-05
    %v233 = vadd.f32 %v217, 1e-05
    %v234 = vadd.f32 %v218, 1e-05
    %v235 = vrsqrt.pop %v219
    %v236 = vrsqrt.pop %v220
    %v237 = vrsqrt.pop %v221
    %v238 = vrsqrt.pop %v222
    %v239 = vrsqrt.pop %v223
    %v240 = vrsqrt.pop %v224
    %v241 = vrsqrt.pop %v225
    %v242 = vrsqrt.pop %v226
    %v243 = vrsqrt.pop %v227
    %v244 = vrsqrt.pop %v228
    %v245 = vrsqrt.pop %v229
    %v246 = vrsqrt.pop %v230
    %v247 = vrsqrt.pop %v231
    %v248 = vrsqrt.pop %v232
    %v249 = vrsqrt.pop %v233
    %v250 = vrsqrt.pop %v234
    %v251 = vmul.f32 %v123, %v235
    %v252 = vmul.f32 %v124, %v236
    %v253 = vmul.f32 %v125, %v237
    %v254 = vmul.f32 %v126, %v238
    %v255 = vmul.f32 %v127, %v239
    %v256 = vmul.f32 %v128, %v240
    %v257 = vmul.f32 %v129, %v241
    %v258 = vmul.f32 %v130, %v242
    %v259 = vmul.f32 %v131, %v243
    %v260 = vmul.f32 %v132, %v244
    %v261 = vmul.f32 %v133, %v245
    %v262 = vmul.f32 %v134, %v246
    %v263 = vmul.f32 %v135, %v247
    %v264 = vmul.f32 %v136, %v248
    %v265 = vmul.f32 %v137, %v249
    %v266 = vmul.f32 %v138, %v250
    %v267 = vld [vmem:[%s1] sm:$0x1]
    %v269 = vlaneseq
    %v270 = vshrl.u32 %v269, 7
    %v271 = vsub.s32 0, %v270
    %v272 = vrot.slane %v267, %v271
    %v274 = vmul.f32 %v251, %v272
    %v275 = vmul.f32 %v252, %v272
    %v276 = vmul.f32 %v253, %v272
    %v277 = vmul.f32 %v254, %v272
    %v278 = vmul.f32 %v255, %v272
    %v279 = vmul.f32 %v256, %v272
    %v280 = vmul.f32 %v257, %v272
    %v281 = vmul.f32 %v258, %v272
    %v282 = vmul.f32 %v259, %v272
    %v283 = vmul.f32 %v260, %v272
    %v284 = vmul.f32 %v261, %v272
    %v285 = vmul.f32 %v262, %v272
    %v286 = vmul.f32 %v263, %v272
    %v287 = vmul.f32 %v264, %v272
    %v288 = vmul.f32 %v265, %v272
    %v289 = vmul.f32 %v266, %v272
    %v290 = vld [vmem:[%s2] sm:$0x1]
    %v292 = vlaneseq
    %v293 = vshrl.u32 %v292, 7
    %v294 = vsub.s32 0, %v293
    %v295 = vrot.slane %v290, %v294
    %v297 = vadd.f32 %v274, %v295
    %v298 = vadd.f32 %v275, %v295
    %v299 = vadd.f32 %v276, %v295
    %v300 = vadd.f32 %v277, %v295
    %v301 = vadd.f32 %v278, %v295
    %v302 = vadd.f32 %v279, %v295
    %v303 = vadd.f32 %v280, %v295
    %v304 = vadd.f32 %v281, %v295
    %v305 = vadd.f32 %v282, %v295
    %v306 = vadd.f32 %v283, %v295
    %v307 = vadd.f32 %v284, %v295
    %v308 = vadd.f32 %v285, %v295
    %v309 = vadd.f32 %v286, %v295
    %v310 = vadd.f32 %v287, %v295
    %v311 = vadd.f32 %v288, %v295
    %v312 = vadd.f32 %v289, %v295
    %v313 = vmul.f32 %v297, %v297
    %v314 = vmul.f32 %v298, %v298
    %v315 = vmul.f32 %v299, %v299
    %v316 = vmul.f32 %v300, %v300
    %v317 = vmul.f32 %v301, %v301
    %v318 = vmul.f32 %v302, %v302
    %v319 = vmul.f32 %v303, %v303
    %v320 = vmul.f32 %v304, %v304
    %v321 = vmul.f32 %v305, %v305
    %v322 = vmul.f32 %v306, %v306
    %v323 = vmul.f32 %v307, %v307
    %v324 = vmul.f32 %v308, %v308
    %v325 = vmul.f32 %v309, %v309
    %v326 = vmul.f32 %v310, %v310
    %v327 = vmul.f32 %v311, %v311
    %v328 = vmul.f32 %v312, %v312
    %v329 = vsel %vm57, %v313, 0.0
    %330 = vadd.xlane.f32.xlu0 %v329
    %v331 = vpop.xlane.xlu0 %330
    %v332 = vsel %vm57, %v314, 0.0
    %333 = vadd.xlane.f32.xlu0 %v332
    %v334 = vpop.xlane.xlu0 %333
    %v335 = vsel %vm57, %v315, 0.0
    %336 = vadd.xlane.f32.xlu0 %v335
    %v337 = vpop.xlane.xlu0 %336
    %v338 = vsel %vm57, %v316, 0.0
    %339 = vadd.xlane.f32.xlu0 %v338
    %v340 = vpop.xlane.xlu0 %339
    %v341 = vsel %vm57, %v317, 0.0
    %342 = vadd.xlane.f32.xlu0 %v341
    %v343 = vpop.xlane.xlu0 %342
    %v344 = vsel %vm57, %v318, 0.0
    %345 = vadd.xlane.f32.xlu0 %v344
    %v346 = vpop.xlane.xlu0 %345
    %v347 = vsel %vm57, %v319, 0.0
    %348 = vadd.xlane.f32.xlu0 %v347
    %v349 = vpop.xlane.xlu0 %348
    %v350 = vsel %vm57, %v320, 0.0
    %351 = vadd.xlane.f32.xlu0 %v350
    %v352 = vpop.xlane.xlu0 %351
    %v353 = vsel %vm57, %v321, 0.0
    %354 = vadd.xlane.f32.xlu0 %v353
    %v355 = vpop.xlane.xlu0 %354
    %v356 = vsel %vm57, %v322, 0.0
    %357 = vadd.xlane.f32.xlu0 %v356
    %v358 = vpop.xlane.xlu0 %357
    %v359 = vsel %vm57, %v323, 0.0
    %360 = vadd.xlane.f32.xlu0 %v359
    %v361 = vpop.xlane.xlu0 %360
    %v362 = vsel %vm57, %v324, 0.0
    %363 = vadd.xlane.f32.xlu0 %v362
    %v364 = vpop.xlane.xlu0 %363
    %v365 = vsel %vm57, %v325, 0.0
    %366 = vadd.xlane.f32.xlu0 %v365
    %v367 = vpop.xlane.xlu0 %366
    %v368 = vsel %vm57, %v326, 0.0
    %369 = vadd.xlane.f32.xlu0 %v368
    %v370 = vpop.xlane.xlu0 %369
    %v371 = vsel %vm57, %v327, 0.0
    %372 = vadd.xlane.f32.xlu0 %v371
    %v373 = vpop.xlane.xlu0 %372
    %v374 = vsel %vm57, %v328, 0.0
    %375 = vadd.xlane.f32.xlu0 %v374
    %v376 = vpop.xlane.xlu0 %375
    %v377 = vadd.f32 %v331, 1.0
    %v378 = vadd.f32 %v334, 1.0
    %v379 = vadd.f32 %v337, 1.0
    %v380 = vadd.f32 %v340, 1.0
    %v381 = vadd.f32 %v343, 1.0
    %v382 = vadd.f32 %v346, 1.0
    %v383 = vadd.f32 %v349, 1.0
    %v384 = vadd.f32 %v352, 1.0
    %v385 = vadd.f32 %v355, 1.0
    %v386 = vadd.f32 %v358, 1.0
    %v387 = vadd.f32 %v361, 1.0
    %v388 = vadd.f32 %v364, 1.0
    %v389 = vadd.f32 %v367, 1.0
    %v390 = vadd.f32 %v370, 1.0
    %v391 = vadd.f32 %v373, 1.0
    %v392 = vadd.f32 %v376, 1.0
    %v393 = vrsqrt.pop %v377
    %v394 = vmul.f32 %v377, %v393
    %vm395 = vcmp.eq.f32.partialorder %v377, inf
    %v396 = vsel %vm395, %v377, %v394
    %vm397 = vcmp.eq.f32.partialorder %v377, 0.0
    %v398 = vand.u32 %v377, 2147483648
    %v399 = vsel %vm397, %v398, %v396
    %v400 = vrsqrt.pop %v378
    %v401 = vmul.f32 %v378, %v400
    %vm402 = vcmp.eq.f32.partialorder %v378, inf
    %v403 = vsel %vm402, %v378, %v401
    %vm404 = vcmp.eq.f32.partialorder %v378, 0.0
    %v405 = vand.u32 %v378, 2147483648
    %v406 = vsel %vm404, %v405, %v403
    %v407 = vrsqrt.pop %v379
    %v408 = vmul.f32 %v379, %v407
    %vm409 = vcmp.eq.f32.partialorder %v379, inf
    %v410 = vsel %vm409, %v379, %v408
    %vm411 = vcmp.eq.f32.partialorder %v379, 0.0
    %v412 = vand.u32 %v379, 2147483648
    %v413 = vsel %vm411, %v412, %v410
    %v414 = vrsqrt.pop %v380
    %v415 = vmul.f32 %v380, %v414
    %vm416 = vcmp.eq.f32.partialorder %v380, inf
    %v417 = vsel %vm416, %v380, %v415
    %vm418 = vcmp.eq.f32.partialorder %v380, 0.0
    %v419 = vand.u32 %v380, 2147483648
    %v420 = vsel %vm418, %v419, %v417
    %v421 = vrsqrt.pop %v381
    %v422 = vmul.f32 %v381, %v421
    %vm423 = vcmp.eq.f32.partialorder %v381, inf
    %v424 = vsel %vm423, %v381, %v422
    %vm425 = vcmp.eq.f32.partialorder %v381, 0.0
    %v426 = vand.u32 %v381, 2147483648
    %v427 = vsel %vm425, %v426, %v424
    %v428 = vrsqrt.pop %v382
    %v429 = vmul.f32 %v382, %v428
    %vm430 = vcmp.eq.f32.partialorder %v382, inf
    %v431 = vsel %vm430, %v382, %v429
    %vm432 = vcmp.eq.f32.partialorder %v382, 0.0
    %v433 = vand.u32 %v382, 2147483648
    %v434 = vsel %vm432, %v433, %v431
    %v435 = vrsqrt.pop %v383
    %v436 = vmul.f32 %v383, %v435
    %vm437 = vcmp.eq.f32.partialorder %v383, inf
    %v438 = vsel %vm437, %v383, %v436
    %vm439 = vcmp.eq.f32.partialorder %v383, 0.0
    %v440 = vand.u32 %v383, 2147483648
    %v441 = vsel %vm439, %v440, %v438
    %v442 = vrsqrt.pop %v384
    %v443 = vmul.f32 %v384, %v442
    %vm444 = vcmp.eq.f32.partialorder %v384, inf
    %v445 = vsel %vm444, %v384, %v443
    %vm446 = vcmp.eq.f32.partialorder %v384, 0.0
    %v447 = vand.u32 %v384, 2147483648
    %v448 = vsel %vm446, %v447, %v445
    %v449 = vrsqrt.pop %v385
    %v450 = vmul.f32 %v385, %v449
    %vm451 = vcmp.eq.f32.partialorder %v385, inf
    %v452 = vsel %vm451, %v385, %v450
    %vm453 = vcmp.eq.f32.partialorder %v385, 0.0
    %v454 = vand.u32 %v385, 2147483648
    %v455 = vsel %vm453, %v454, %v452
    %v456 = vrsqrt.pop %v386
    %v457 = vmul.f32 %v386, %v456
    %vm458 = vcmp.eq.f32.partialorder %v386, inf
    %v459 = vsel %vm458, %v386, %v457
    %vm460 = vcmp.eq.f32.partialorder %v386, 0.0
    %v461 = vand.u32 %v386, 2147483648
    %v462 = vsel %vm460, %v461, %v459
    %v463 = vrsqrt.pop %v387
    %v464 = vmul.f32 %v387, %v463
    %vm465 = vcmp.eq.f32.partialorder %v387, inf
    %v466 = vsel %vm465, %v387, %v464
    %vm467 = vcmp.eq.f32.partialorder %v387, 0.0
    %v468 = vand.u32 %v387, 2147483648
    %v469 = vsel %vm467, %v468, %v466
    %v470 = vrsqrt.pop %v388
    %v471 = vmul.f32 %v388, %v470
    %vm472 = vcmp.eq.f32.partialorder %v388, inf
    %v473 = vsel %vm472, %v388, %v471
    %vm474 = vcmp.eq.f32.partialorder %v388, 0.0
    %v475 = vand.u32 %v388, 2147483648
    %v476 = vsel %vm474, %v475, %v473
    %v477 = vrsqrt.pop %v389
    %v478 = vmul.f32 %v389, %v477
    %vm479 = vcmp.eq.f32.partialorder %v389, inf
    %v480 = vsel %vm479, %v389, %v478
    %vm481 = vcmp.eq.f32.partialorder %v389, 0.0
    %v482 = vand.u32 %v389, 2147483648
    %v483 = vsel %vm481, %v482, %v480
    %v484 = vrsqrt.pop %v390
    %v485 = vmul.f32 %v390, %v484
    %vm486 = vcmp.eq.f32.partialorder %v390, inf
    %v487 = vsel %vm486, %v390, %v485
    %vm488 = vcmp.eq.f32.partialorder %v390, 0.0
    %v489 = vand.u32 %v390, 2147483648
    %v490 = vsel %vm488, %v489, %v487
    %v491 = vrsqrt.pop %v391
    %v492 = vmul.f32 %v391, %v491
    %vm493 = vcmp.eq.f32.partialorder %v391, inf
    %v494 = vsel %vm493, %v391, %v492
    %vm495 = vcmp.eq.f32.partialorder %v391, 0.0
    %v496 = vand.u32 %v391, 2147483648
    %v497 = vsel %vm495, %v496, %v494
    %v498 = vrsqrt.pop %v392
    %v499 = vmul.f32 %v392, %v498
    %vm500 = vcmp.eq.f32.partialorder %v392, inf
    %v501 = vsel %vm500, %v392, %v499
    %vm502 = vcmp.eq.f32.partialorder %v392, 0.0
    %v503 = vand.u32 %v392, 2147483648
    %v504 = vsel %vm502, %v503, %v501
    %v505 = vld [vmem:[%s3] sm:$0x1]
    %v507 = vlaneseq
    %v508 = vshrl.u32 %v507, 7
    %v509 = vsub.s32 0, %v508
    %v510 = vrot.slane %v505, %v509
    %v512 = vmul.f32 %v399, %v510
    %v513 = vmul.f32 %v406, %v510
    %v514 = vmul.f32 %v413, %v510
    %v515 = vmul.f32 %v420, %v510
    %v516 = vmul.f32 %v427, %v510
    %v517 = vmul.f32 %v434, %v510
    %v518 = vmul.f32 %v441, %v510
    %v519 = vmul.f32 %v448, %v510
    %v520 = vmul.f32 %v455, %v510
    %v521 = vmul.f32 %v462, %v510
    %v522 = vmul.f32 %v469, %v510
    %v523 = vmul.f32 %v476, %v510
    %v524 = vmul.f32 %v483, %v510
    %v525 = vmul.f32 %v490, %v510
    %v526 = vmul.f32 %v497, %v510
    %v527 = vmul.f32 %v504, %v510
    %v528 = vld [vmem:[%s4] sm:$0xff]
    %v529 = vld [vmem:[%s4 + $0x8] sm:$0xff]
    %v531 = vsel %vm57, %v297, 0
    %v534 = vsel %vm57, %v298, 0
    %v537 = vsel %vm57, %v299, 0
    %v540 = vsel %vm57, %v300, 0
    %v543 = vsel %vm57, %v301, 0
    %v546 = vsel %vm57, %v302, 0
    %v549 = vsel %vm57, %v303, 0
    %v552 = vsel %vm57, %v304, 0
    %v555 = vsel %vm57, %v305, 0
    %v558 = vsel %vm57, %v306, 0
    %v561 = vsel %vm57, %v307, 0
    %v564 = vsel %vm57, %v308, 0
    %v567 = vsel %vm57, %v309, 0
    %v570 = vsel %vm57, %v310, 0
    %v573 = vsel %vm57, %v311, 0
    %v576 = vsel %vm57, %v312, 0
    %578 = vmatprep.subr.mxu0 0.0
    %579 = vmatpush1.msra.mxu0 0.0
    %580 = vmatprep.subr.mxu0 0.0
    %581 = vmatpush1.msra.mxu0 0.0
    %582 = vmatprep.subr.mxu0 0.0
    %583 = vmatpush1.msra.mxu0 0.0
    %584 = vmatprep.subr.mxu0 0.0
    %585 = vmatpush1.msra.mxu0 0.0
    %586 = vmatprep.subr.mxu0 0.0
    %587 = vmatpush1.msra.mxu0 0.0
    %588 = vmatprep.subr.mxu0 0.0
    %589 = vmatpush1.msra.mxu0 0.0
    %590 = vmatprep.subr.mxu0 0.0
    %591 = vmatpush1.msra.mxu0 0.0
    %592 = vmatprep.subr.mxu0 0.0
    %593 = vmatpush1.msra.mxu0 0.0
    %594 = vmatprep.subr.mxu0 0.0
    %595 = vmatpush1.msra.mxu0 0.0
    %596 = vmatprep.subr.mxu0 0.0
    %597 = vmatpush1.msra.mxu0 0.0
    %598 = vmatprep.subr.mxu0 0.0
    %599 = vmatpush1.msra.mxu0 0.0
    %600 = vmatprep.subr.mxu0 0.0
    %601 = vmatpush1.msra.mxu0 0.0
    %602 = vmatprep.subr.mxu0 0.0
    %603 = vmatpush1.msra.mxu0 0.0
    %604 = vmatprep.subr.mxu0 0.0
    %605 = vmatpush1.msra.mxu0 0.0
    %606 = vmatprep.subr.mxu0 0.0
    %607 = vmatpush1.msra.mxu0 %v529
    %608 = vmatprep.subr.mxu0 0.0
    %609 = vmatpush1.msra.mxu0 %v528
    %610 = vmatprep.subr.mxu0 0.0
    %611 = vmatpush2.msra.mxu0 0.0
    %612 = vmatprep.subr.mxu0 0.0
    %613 = vmatpush2.msra.mxu0 0.0
    %614 = vmatprep.subr.mxu0 0.0
    %615 = vmatpush2.msra.mxu0 0.0
    %616 = vmatprep.subr.mxu0 0.0
    %617 = vmatpush2.msra.mxu0 0.0
    %618 = vmatprep.subr.mxu0 0.0
    %619 = vmatpush2.msra.mxu0 0.0
    %620 = vmatprep.subr.mxu0 0.0
    %621 = vmatpush2.msra.mxu0 0.0
    %622 = vmatprep.subr.mxu0 0.0
    %623 = vmatpush2.msra.mxu0 0.0
    %624 = vmatprep.subr.mxu0 0.0
    %625 = vmatpush2.msra.mxu0 0.0
    %626 = vmatprep.subr.mxu0 0.0
    %627 = vmatpush2.msra.mxu0 0.0
    %628 = vmatprep.subr.mxu0 0.0
    %629 = vmatpush2.msra.mxu0 0.0
    %630 = vmatprep.subr.mxu0 0.0
    %631 = vmatpush2.msra.mxu0 0.0
    %632 = vmatprep.subr.mxu0 0.0
    %633 = vmatpush2.msra.mxu0 0.0
    %634 = vmatprep.subr.mxu0 0.0
    %635 = vmatpush2.msra.mxu0 0.0
    %636 = vmatprep.subr.mxu0 0.0
    %637 = vmatpush2.msra.mxu0 0.0
    %638 = vmatprep.subr.mxu0 0.0
    %639 = vmatpush2.msra.mxu0 0.0
    %640 = vmatprep.subr.mxu0 0.0
    %641 = vmatpush2.msra.mxu0 0.0
    %642 = vmatprep.mubr.f32.mxu0 0.0
    %643 = vmatmul.mubr.f32.gmra.mxu0 %v531
    %v644 = vpop.f32.mrf.mxu0
    %v645 = vadd.f32 0.0, %v644
    %v646 = vpop.f32.mrf.mxu0
    %647 = vmatprep.mubr.f32.mxu0 0.0
    %648 = vmatmul.mubr.f32.gmra.mxu0 %v534
    %v649 = vpop.f32.mrf.mxu0
    %v650 = vadd.f32 0.0, %v649
    %v651 = vpop.f32.mrf.mxu0
    %652 = vmatprep.mubr.f32.mxu0 0.0
    %653 = vmatmul.mubr.f32.gmra.mxu0 %v537
    %v654 = vpop.f32.mrf.mxu0
    %v655 = vadd.f32 0.0, %v654
    %v656 = vpop.f32.mrf.mxu0
    %657 = vmatprep.mubr.f32.mxu0 0.0
    %658 = vmatmul.mubr.f32.gmra.mxu0 %v540
    %v659 = vpop.f32.mrf.mxu0
    %v660 = vadd.f32 0.0, %v659
    %v661 = vpop.f32.mrf.mxu0
    %662 = vmatprep.mubr.f32.mxu0 0.0
    %663 = vmatmul.mubr.f32.gmra.mxu0 %v543
    %v664 = vpop.f32.mrf.mxu0
    %v665 = vadd.f32 0.0, %v664
    %v666 = vpop.f32.mrf.mxu0
    %667 = vmatprep.mubr.f32.mxu0 0.0
    %668 = vmatmul.mubr.f32.gmra.mxu0 %v546
    %v669 = vpop.f32.mrf.mxu0
    %v670 = vadd.f32 0.0, %v669
    %v671 = vpop.f32.mrf.mxu0
    %672 = vmatprep.mubr.f32.mxu0 0.0
    %673 = vmatmul.mubr.f32.gmra.mxu0 %v549
    %v674 = vpop.f32.mrf.mxu0
    %v675 = vadd.f32 0.0, %v674
    %v676 = vpop.f32.mrf.mxu0
    %677 = vmatprep.mubr.f32.mxu0 0.0
    %678 = vmatmul.mubr.f32.gmra.mxu0 %v552
    %v679 = vpop.f32.mrf.mxu0
    %v680 = vadd.f32 0.0, %v679
    %v681 = vpop.f32.mrf.mxu0
    %682 = vmatprep.mubr.f32.mxu0 0.0
    %683 = vmatmul.mubr.f32.gmra.mxu0 %v555
    %v684 = vpop.f32.mrf.mxu0
    %v685 = vadd.f32 0.0, %v684
    %v686 = vpop.f32.mrf.mxu0
    %687 = vmatprep.mubr.f32.mxu0 0.0
    %688 = vmatmul.mubr.f32.gmra.mxu0 %v558
    %v689 = vpop.f32.mrf.mxu0
    %v690 = vadd.f32 0.0, %v689
    %v691 = vpop.f32.mrf.mxu0
    %692 = vmatprep.mubr.f32.mxu0 0.0
    %693 = vmatmul.mubr.f32.gmra.mxu0 %v561
    %v694 = vpop.f32.mrf.mxu0
    %v695 = vadd.f32 0.0, %v694
    %v696 = vpop.f32.mrf.mxu0
    %697 = vmatprep.mubr.f32.mxu0 0.0
    %698 = vmatmul.mubr.f32.gmra.mxu0 %v564
    %v699 = vpop.f32.mrf.mxu0
    %v700 = vadd.f32 0.0, %v699
    %v701 = vpop.f32.mrf.mxu0
    %702 = vmatprep.mubr.f32.mxu0 0.0
    %703 = vmatmul.mubr.f32.gmra.mxu0 %v567
    %v704 = vpop.f32.mrf.mxu0
    %v705 = vadd.f32 0.0, %v704
    %v706 = vpop.f32.mrf.mxu0
    %707 = vmatprep.mubr.f32.mxu0 0.0
    %708 = vmatmul.mubr.f32.gmra.mxu0 %v570
    %v709 = vpop.f32.mrf.mxu0
    %v710 = vadd.f32 0.0, %v709
    %v711 = vpop.f32.mrf.mxu0
    %712 = vmatprep.mubr.f32.mxu0 0.0
    %713 = vmatmul.mubr.f32.gmra.mxu0 %v573
    %v714 = vpop.f32.mrf.mxu0
    %v715 = vadd.f32 0.0, %v714
    %v716 = vpop.f32.mrf.mxu0
    %717 = vmatprep.mubr.f32.mxu0 0.0
    %718 = vmatmul.mubr.f32.gmra.mxu0 %v576
    %v719 = vpop.f32.mrf.mxu0
    %v720 = vadd.f32 0.0, %v719
    %v721 = vpop.f32.mrf.mxu0
    %722 = vdwg.mxu0
    %v723 = vadd.f32 %v512, %v645
    %v724 = vadd.f32 %v513, %v650
    %v725 = vadd.f32 %v514, %v655
    %v726 = vadd.f32 %v515, %v660
    %v727 = vadd.f32 %v516, %v665
    %v728 = vadd.f32 %v517, %v670
    %v729 = vadd.f32 %v518, %v675
    %v730 = vadd.f32 %v519, %v680
    %v731 = vadd.f32 %v520, %v685
    %v732 = vadd.f32 %v521, %v690
    %v733 = vadd.f32 %v522, %v695
    %v734 = vadd.f32 %v523, %v700
    %v735 = vadd.f32 %v524, %v705
    %v736 = vadd.f32 %v525, %v710
    %v737 = vadd.f32 %v526, %v715
    %v738 = vadd.f32 %v527, %v720
    %v739 = vld [vmem:[%s5] sm:$0x1]
    %v741 = vlaneseq
    %v742 = vshrl.u32 %v741, 7
    %v743 = vsub.s32 0, %v742
    %v744 = vrot.slane %v739, %v743
    %v746 = vadd.f32 %v723, %v744
    %v747 = vadd.f32 %v724, %v744
    %v748 = vadd.f32 %v725, %v744
    %v749 = vadd.f32 %v726, %v744
    %v750 = vadd.f32 %v727, %v744
    %v751 = vadd.f32 %v728, %v744
    %v752 = vadd.f32 %v729, %v744
    %v753 = vadd.f32 %v730, %v744
    %v754 = vadd.f32 %v731, %v744
    %v755 = vadd.f32 %v732, %v744
    %v756 = vadd.f32 %v733, %v744
    %v757 = vadd.f32 %v734, %v744
    %v758 = vadd.f32 %v735, %v744
    %v759 = vadd.f32 %v736, %v744
    %v760 = vadd.f32 %v737, %v744
    %v761 = vadd.f32 %v738, %v744
    %v762 = vadd.f32 %v746, %v41
    %v763 = vadd.f32 %v747, %v42
    %v764 = vadd.f32 %v748, %v43
    %v765 = vadd.f32 %v749, %v44
    %v766 = vadd.f32 %v750, %v45
    %v767 = vadd.f32 %v751, %v46
    %v768 = vadd.f32 %v752, %v47
    %v769 = vadd.f32 %v753, %v48
    %v770 = vadd.f32 %v754, %v49
    %v771 = vadd.f32 %v755, %v50
    %v772 = vadd.f32 %v756, %v51
    %v773 = vadd.f32 %v757, %v52
    %v774 = vadd.f32 %v758, %v53
    %v775 = vadd.f32 %v759, %v54
    %v776 = vadd.f32 %v760, %v55
    %v777 = vadd.f32 %v761, %v56
    %v778 = vmax.f32 %v762, 0.0
    %v779 = vmax.f32 %v763, 0.0
    %v780 = vmax.f32 %v764, 0.0
    %v781 = vmax.f32 %v765, 0.0
    %v782 = vmax.f32 %v766, 0.0
    %v783 = vmax.f32 %v767, 0.0
    %v784 = vmax.f32 %v768, 0.0
    %v785 = vmax.f32 %v769, 0.0
    %v786 = vmax.f32 %v770, 0.0
    %v787 = vmax.f32 %v771, 0.0
    %v788 = vmax.f32 %v772, 0.0
    %v789 = vmax.f32 %v773, 0.0
    %v790 = vmax.f32 %v774, 0.0
    %v791 = vmax.f32 %v775, 0.0
    %v792 = vmax.f32 %v776, 0.0
    %v793 = vmax.f32 %v777, 0.0
    %v794 = vsel %vm57, %v778, 0.0
    %795 = vadd.xlane.f32.xlu0 %v794
    %v796 = vpop.xlane.xlu0 %795
    %v797 = vsel %vm57, %v779, 0.0
    %798 = vadd.xlane.f32.xlu0 %v797
    %v799 = vpop.xlane.xlu0 %798
    %v800 = vsel %vm57, %v780, 0.0
    %801 = vadd.xlane.f32.xlu0 %v800
    %v802 = vpop.xlane.xlu0 %801
    %v803 = vsel %vm57, %v781, 0.0
    %804 = vadd.xlane.f32.xlu0 %v803
    %v805 = vpop.xlane.xlu0 %804
    %v806 = vsel %vm57, %v782, 0.0
    %807 = vadd.xlane.f32.xlu0 %v806
    %v808 = vpop.xlane.xlu0 %807
    %v809 = vsel %vm57, %v783, 0.0
    %810 = vadd.xlane.f32.xlu0 %v809
    %v811 = vpop.xlane.xlu0 %810
    %v812 = vsel %vm57, %v784, 0.0
    %813 = vadd.xlane.f32.xlu0 %v812
    %v814 = vpop.xlane.xlu0 %813
    %v815 = vsel %vm57, %v785, 0.0
    %816 = vadd.xlane.f32.xlu0 %v815
    %v817 = vpop.xlane.xlu0 %816
    %v818 = vsel %vm57, %v786, 0.0
    %819 = vadd.xlane.f32.xlu0 %v818
    %v820 = vpop.xlane.xlu0 %819
    %v821 = vsel %vm57, %v787, 0.0
    %822 = vadd.xlane.f32.xlu0 %v821
    %v823 = vpop.xlane.xlu0 %822
    %v824 = vsel %vm57, %v788, 0.0
    %825 = vadd.xlane.f32.xlu0 %v824
    %v826 = vpop.xlane.xlu0 %825
    %v827 = vsel %vm57, %v789, 0.0
    %828 = vadd.xlane.f32.xlu0 %v827
    %v829 = vpop.xlane.xlu0 %828
    %v830 = vsel %vm57, %v790, 0.0
    %831 = vadd.xlane.f32.xlu0 %v830
    %v832 = vpop.xlane.xlu0 %831
    %v833 = vsel %vm57, %v791, 0.0
    %834 = vadd.xlane.f32.xlu0 %v833
    %v835 = vpop.xlane.xlu0 %834
    %v836 = vsel %vm57, %v792, 0.0
    %837 = vadd.xlane.f32.xlu0 %v836
    %v838 = vpop.xlane.xlu0 %837
    %v839 = vsel %vm57, %v793, 0.0
    %840 = vadd.xlane.f32.xlu0 %v839
    %v841 = vpop.xlane.xlu0 %840
    %v842 = vmul.f32 %v796, %v106
    %v843 = vmul.f32 %v799, %v106
    %v844 = vmul.f32 %v802, %v106
    %v845 = vmul.f32 %v805, %v106
    %v846 = vmul.f32 %v808, %v106
    %v847 = vmul.f32 %v811, %v106
    %v848 = vmul.f32 %v814, %v106
    %v849 = vmul.f32 %v817, %v106
    %v850 = vmul.f32 %v820, %v106
    %v851 = vmul.f32 %v823, %v106
    %v852 = vmul.f32 %v826, %v106
    %v853 = vmul.f32 %v829, %v106
    %v854 = vmul.f32 %v832, %v106
    %v855 = vmul.f32 %v835, %v106
    %v856 = vmul.f32 %v838, %v106
    %v857 = vmul.f32 %v841, %v106
    %v858 = vsub.f32 %v778, %v842
    %v859 = vsub.f32 %v779, %v843
    %v860 = vsub.f32 %v780, %v844
    %v861 = vsub.f32 %v781, %v845
    %v862 = vsub.f32 %v782, %v846
    %v863 = vsub.f32 %v783, %v847
    %v864 = vsub.f32 %v784, %v848
    %v865 = vsub.f32 %v785, %v849
    %v866 = vsub.f32 %v786, %v850
    %v867 = vsub.f32 %v787, %v851
    %v868 = vsub.f32 %v788, %v852
    %v869 = vsub.f32 %v789, %v853
    %v870 = vsub.f32 %v790, %v854
    %v871 = vsub.f32 %v791, %v855
    %v872 = vsub.f32 %v792, %v856
    %v873 = vsub.f32 %v793, %v857
    %v874 = vmul.f32 %v858, %v858
    %v875 = vmul.f32 %v859, %v859
    %v876 = vmul.f32 %v860, %v860
    %v877 = vmul.f32 %v861, %v861
    %v878 = vmul.f32 %v862, %v862
    %v879 = vmul.f32 %v863, %v863
    %v880 = vmul.f32 %v864, %v864
    %v881 = vmul.f32 %v865, %v865
    %v882 = vmul.f32 %v866, %v866
    %v883 = vmul.f32 %v867, %v867
    %v884 = vmul.f32 %v868, %v868
    %v885 = vmul.f32 %v869, %v869
    %v886 = vmul.f32 %v870, %v870
    %v887 = vmul.f32 %v871, %v871
    %v888 = vmul.f32 %v872, %v872
    %v889 = vmul.f32 %v873, %v873
    %v890 = vsel %vm57, %v874, 0.0
    %891 = vadd.xlane.f32.xlu0 %v890
    %v892 = vpop.xlane.xlu0 %891
    %v893 = vsel %vm57, %v875, 0.0
    %894 = vadd.xlane.f32.xlu0 %v893
    %v895 = vpop.xlane.xlu0 %894
    %v896 = vsel %vm57, %v876, 0.0
    %897 = vadd.xlane.f32.xlu0 %v896
    %v898 = vpop.xlane.xlu0 %897
    %v899 = vsel %vm57, %v877, 0.0
    %900 = vadd.xlane.f32.xlu0 %v899
    %v901 = vpop.xlane.xlu0 %900
    %v902 = vsel %vm57, %v878, 0.0
    %903 = vadd.xlane.f32.xlu0 %v902
    %v904 = vpop.xlane.xlu0 %903
    %v905 = vsel %vm57, %v879, 0.0
    %906 = vadd.xlane.f32.xlu0 %v905
    %v907 = vpop.xlane.xlu0 %906
    %v908 = vsel %vm57, %v880, 0.0
    %909 = vadd.xlane.f32.xlu0 %v908
    %v910 = vpop.xlane.xlu0 %909
    %v911 = vsel %vm57, %v881, 0.0
    %912 = vadd.xlane.f32.xlu0 %v911
    %v913 = vpop.xlane.xlu0 %912
    %v914 = vsel %vm57, %v882, 0.0
    %915 = vadd.xlane.f32.xlu0 %v914
    %v916 = vpop.xlane.xlu0 %915
    %v917 = vsel %vm57, %v883, 0.0
    %918 = vadd.xlane.f32.xlu0 %v917
    %v919 = vpop.xlane.xlu0 %918
    %v920 = vsel %vm57, %v884, 0.0
    %921 = vadd.xlane.f32.xlu0 %v920
    %v922 = vpop.xlane.xlu0 %921
    %v923 = vsel %vm57, %v885, 0.0
    %924 = vadd.xlane.f32.xlu0 %v923
    %v925 = vpop.xlane.xlu0 %924
    %v926 = vsel %vm57, %v886, 0.0
    %927 = vadd.xlane.f32.xlu0 %v926
    %v928 = vpop.xlane.xlu0 %927
    %v929 = vsel %vm57, %v887, 0.0
    %930 = vadd.xlane.f32.xlu0 %v929
    %v931 = vpop.xlane.xlu0 %930
    %v932 = vsel %vm57, %v888, 0.0
    %933 = vadd.xlane.f32.xlu0 %v932
    %v934 = vpop.xlane.xlu0 %933
    %v935 = vsel %vm57, %v889, 0.0
    %936 = vadd.xlane.f32.xlu0 %v935
    %v937 = vpop.xlane.xlu0 %936
    %v938 = vmul.f32 %v892, %v106
    %v939 = vmul.f32 %v895, %v106
    %v940 = vmul.f32 %v898, %v106
    %v941 = vmul.f32 %v901, %v106
    %v942 = vmul.f32 %v904, %v106
    %v943 = vmul.f32 %v907, %v106
    %v944 = vmul.f32 %v910, %v106
    %v945 = vmul.f32 %v913, %v106
    %v946 = vmul.f32 %v916, %v106
    %v947 = vmul.f32 %v919, %v106
    %v948 = vmul.f32 %v922, %v106
    %v949 = vmul.f32 %v925, %v106
    %v950 = vmul.f32 %v928, %v106
    %v951 = vmul.f32 %v931, %v106
    %v952 = vmul.f32 %v934, %v106
    %v953 = vmul.f32 %v937, %v106
    %v954 = vadd.f32 %v938, 1e-05
    %v955 = vadd.f32 %v939, 1e-05
    %v956 = vadd.f32 %v940, 1e-05
    %v957 = vadd.f32 %v941, 1e-05
    %v958 = vadd.f32 %v942, 1e-05
    %v959 = vadd.f32 %v943, 1e-05
    %v960 = vadd.f32 %v944, 1e-05
    %v961 = vadd.f32 %v945, 1e-05
    %v962 = vadd.f32 %v946, 1e-05
    %v963 = vadd.f32 %v947, 1e-05
    %v964 = vadd.f32 %v948, 1e-05
    %v965 = vadd.f32 %v949, 1e-05
    %v966 = vadd.f32 %v950, 1e-05
    %v967 = vadd.f32 %v951, 1e-05
    %v968 = vadd.f32 %v952, 1e-05
    %v969 = vadd.f32 %v953, 1e-05
    %v970 = vrsqrt.pop %v954
    %v971 = vrsqrt.pop %v955
    %v972 = vrsqrt.pop %v956
    %v973 = vrsqrt.pop %v957
    %v974 = vrsqrt.pop %v958
    %v975 = vrsqrt.pop %v959
    %v976 = vrsqrt.pop %v960
    %v977 = vrsqrt.pop %v961
    %v978 = vrsqrt.pop %v962
    %v979 = vrsqrt.pop %v963
    %v980 = vrsqrt.pop %v964
    %v981 = vrsqrt.pop %v965
    %v982 = vrsqrt.pop %v966
    %v983 = vrsqrt.pop %v967
    %v984 = vrsqrt.pop %v968
    %v985 = vrsqrt.pop %v969
    %v986 = vmul.f32 %v858, %v970
    %v987 = vmul.f32 %v859, %v971
    %v988 = vmul.f32 %v860, %v972
    %v989 = vmul.f32 %v861, %v973
    %v990 = vmul.f32 %v862, %v974
    %v991 = vmul.f32 %v863, %v975
    %v992 = vmul.f32 %v864, %v976
    %v993 = vmul.f32 %v865, %v977
    %v994 = vmul.f32 %v866, %v978
    %v995 = vmul.f32 %v867, %v979
    %v996 = vmul.f32 %v868, %v980
    %v997 = vmul.f32 %v869, %v981
    %v998 = vmul.f32 %v870, %v982
    %v999 = vmul.f32 %v871, %v983
    %v1000 = vmul.f32 %v872, %v984
    %v1001 = vmul.f32 %v873, %v985
    %v1002 = vld [vmem:[%s6] sm:$0x1]
    %v1004 = vlaneseq
    %v1005 = vshrl.u32 %v1004, 7
    %v1006 = vsub.s32 0, %v1005
    %v1007 = vrot.slane %v1002, %v1006
    %v1009 = vmul.f32 %v986, %v1007
    %v1010 = vmul.f32 %v987, %v1007
    %v1011 = vmul.f32 %v988, %v1007
    %v1012 = vmul.f32 %v989, %v1007
    %v1013 = vmul.f32 %v990, %v1007
    %v1014 = vmul.f32 %v991, %v1007
    %v1015 = vmul.f32 %v992, %v1007
    %v1016 = vmul.f32 %v993, %v1007
    %v1017 = vmul.f32 %v994, %v1007
    %v1018 = vmul.f32 %v995, %v1007
    %v1019 = vmul.f32 %v996, %v1007
    %v1020 = vmul.f32 %v997, %v1007
    %v1021 = vmul.f32 %v998, %v1007
    %v1022 = vmul.f32 %v999, %v1007
    %v1023 = vmul.f32 %v1000, %v1007
    %v1024 = vmul.f32 %v1001, %v1007
    %v1025 = vld [vmem:[%s7] sm:$0x1]
    %v1027 = vlaneseq
    %v1028 = vshrl.u32 %v1027, 7
    %v1029 = vsub.s32 0, %v1028
    %v1030 = vrot.slane %v1025, %v1029
    %v1032 = vadd.f32 %v1009, %v1030
    %v1033 = vadd.f32 %v1010, %v1030
    %v1034 = vadd.f32 %v1011, %v1030
    %v1035 = vadd.f32 %v1012, %v1030
    %v1036 = vadd.f32 %v1013, %v1030
    %v1037 = vadd.f32 %v1014, %v1030
    %v1038 = vadd.f32 %v1015, %v1030
    %v1039 = vadd.f32 %v1016, %v1030
    %v1040 = vadd.f32 %v1017, %v1030
    %v1041 = vadd.f32 %v1018, %v1030
    %v1042 = vadd.f32 %v1019, %v1030
    %v1043 = vadd.f32 %v1020, %v1030
    %v1044 = vadd.f32 %v1021, %v1030
    %v1045 = vadd.f32 %v1022, %v1030
    %v1046 = vadd.f32 %v1023, %v1030
    %v1047 = vadd.f32 %v1024, %v1030
    %v1048 = vmul.f32 %v1032, %v1032
    %v1049 = vmul.f32 %v1033, %v1033
    %v1050 = vmul.f32 %v1034, %v1034
    %v1051 = vmul.f32 %v1035, %v1035
    %v1052 = vmul.f32 %v1036, %v1036
    %v1053 = vmul.f32 %v1037, %v1037
    %v1054 = vmul.f32 %v1038, %v1038
    %v1055 = vmul.f32 %v1039, %v1039
    %v1056 = vmul.f32 %v1040, %v1040
    %v1057 = vmul.f32 %v1041, %v1041
    %v1058 = vmul.f32 %v1042, %v1042
    %v1059 = vmul.f32 %v1043, %v1043
    %v1060 = vmul.f32 %v1044, %v1044
    %v1061 = vmul.f32 %v1045, %v1045
    %v1062 = vmul.f32 %v1046, %v1046
    %v1063 = vmul.f32 %v1047, %v1047
    %v1064 = vsel %vm57, %v1048, 0.0
    %1065 = vadd.xlane.f32.xlu0 %v1064
    %v1066 = vpop.xlane.xlu0 %1065
    %v1067 = vsel %vm57, %v1049, 0.0
    %1068 = vadd.xlane.f32.xlu0 %v1067
    %v1069 = vpop.xlane.xlu0 %1068
    %v1070 = vsel %vm57, %v1050, 0.0
    %1071 = vadd.xlane.f32.xlu0 %v1070
    %v1072 = vpop.xlane.xlu0 %1071
    %v1073 = vsel %vm57, %v1051, 0.0
    %1074 = vadd.xlane.f32.xlu0 %v1073
    %v1075 = vpop.xlane.xlu0 %1074
    %v1076 = vsel %vm57, %v1052, 0.0
    %1077 = vadd.xlane.f32.xlu0 %v1076
    %v1078 = vpop.xlane.xlu0 %1077
    %v1079 = vsel %vm57, %v1053, 0.0
    %1080 = vadd.xlane.f32.xlu0 %v1079
    %v1081 = vpop.xlane.xlu0 %1080
    %v1082 = vsel %vm57, %v1054, 0.0
    %1083 = vadd.xlane.f32.xlu0 %v1082
    %v1084 = vpop.xlane.xlu0 %1083
    %v1085 = vsel %vm57, %v1055, 0.0
    %1086 = vadd.xlane.f32.xlu0 %v1085
    %v1087 = vpop.xlane.xlu0 %1086
    %v1088 = vsel %vm57, %v1056, 0.0
    %1089 = vadd.xlane.f32.xlu0 %v1088
    %v1090 = vpop.xlane.xlu0 %1089
    %v1091 = vsel %vm57, %v1057, 0.0
    %1092 = vadd.xlane.f32.xlu0 %v1091
    %v1093 = vpop.xlane.xlu0 %1092
    %v1094 = vsel %vm57, %v1058, 0.0
    %1095 = vadd.xlane.f32.xlu0 %v1094
    %v1096 = vpop.xlane.xlu0 %1095
    %v1097 = vsel %vm57, %v1059, 0.0
    %1098 = vadd.xlane.f32.xlu0 %v1097
    %v1099 = vpop.xlane.xlu0 %1098
    %v1100 = vsel %vm57, %v1060, 0.0
    %1101 = vadd.xlane.f32.xlu0 %v1100
    %v1102 = vpop.xlane.xlu0 %1101
    %v1103 = vsel %vm57, %v1061, 0.0
    %1104 = vadd.xlane.f32.xlu0 %v1103
    %v1105 = vpop.xlane.xlu0 %1104
    %v1106 = vsel %vm57, %v1062, 0.0
    %1107 = vadd.xlane.f32.xlu0 %v1106
    %v1108 = vpop.xlane.xlu0 %1107
    %v1109 = vsel %vm57, %v1063, 0.0
    %1110 = vadd.xlane.f32.xlu0 %v1109
    %v1111 = vpop.xlane.xlu0 %1110
    %v1112 = vadd.f32 %v1066, 1.0
    %v1113 = vadd.f32 %v1069, 1.0
    %v1114 = vadd.f32 %v1072, 1.0
    %v1115 = vadd.f32 %v1075, 1.0
    %v1116 = vadd.f32 %v1078, 1.0
    %v1117 = vadd.f32 %v1081, 1.0
    %v1118 = vadd.f32 %v1084, 1.0
    %v1119 = vadd.f32 %v1087, 1.0
    %v1120 = vadd.f32 %v1090, 1.0
    %v1121 = vadd.f32 %v1093, 1.0
    %v1122 = vadd.f32 %v1096, 1.0
    %v1123 = vadd.f32 %v1099, 1.0
    %v1124 = vadd.f32 %v1102, 1.0
    %v1125 = vadd.f32 %v1105, 1.0
    %v1126 = vadd.f32 %v1108, 1.0
    %v1127 = vadd.f32 %v1111, 1.0
    %v1128 = vrsqrt.pop %v1112
    %v1129 = vmul.f32 %v1112, %v1128
    %vm1130 = vcmp.eq.f32.partialorder %v1112, inf
    %v1131 = vsel %vm1130, %v1112, %v1129
    %vm1132 = vcmp.eq.f32.partialorder %v1112, 0.0
    %v1133 = vand.u32 %v1112, 2147483648
    %v1134 = vsel %vm1132, %v1133, %v1131
    %v1135 = vrsqrt.pop %v1113
    %v1136 = vmul.f32 %v1113, %v1135
    %vm1137 = vcmp.eq.f32.partialorder %v1113, inf
    %v1138 = vsel %vm1137, %v1113, %v1136
    %vm1139 = vcmp.eq.f32.partialorder %v1113, 0.0
    %v1140 = vand.u32 %v1113, 2147483648
    %v1141 = vsel %vm1139, %v1140, %v1138
    %v1142 = vrsqrt.pop %v1114
    %v1143 = vmul.f32 %v1114, %v1142
    %vm1144 = vcmp.eq.f32.partialorder %v1114, inf
    %v1145 = vsel %vm1144, %v1114, %v1143
    %vm1146 = vcmp.eq.f32.partialorder %v1114, 0.0
    %v1147 = vand.u32 %v1114, 2147483648
    %v1148 = vsel %vm1146, %v1147, %v1145
    %v1149 = vrsqrt.pop %v1115
    %v1150 = vmul.f32 %v1115, %v1149
    %vm1151 = vcmp.eq.f32.partialorder %v1115, inf
    %v1152 = vsel %vm1151, %v1115, %v1150
    %vm1153 = vcmp.eq.f32.partialorder %v1115, 0.0
    %v1154 = vand.u32 %v1115, 2147483648
    %v1155 = vsel %vm1153, %v1154, %v1152
    %v1156 = vrsqrt.pop %v1116
    %v1157 = vmul.f32 %v1116, %v1156
    %vm1158 = vcmp.eq.f32.partialorder %v1116, inf
    %v1159 = vsel %vm1158, %v1116, %v1157
    %vm1160 = vcmp.eq.f32.partialorder %v1116, 0.0
    %v1161 = vand.u32 %v1116, 2147483648
    %v1162 = vsel %vm1160, %v1161, %v1159
    %v1163 = vrsqrt.pop %v1117
    %v1164 = vmul.f32 %v1117, %v1163
    %vm1165 = vcmp.eq.f32.partialorder %v1117, inf
    %v1166 = vsel %vm1165, %v1117, %v1164
    %vm1167 = vcmp.eq.f32.partialorder %v1117, 0.0
    %v1168 = vand.u32 %v1117, 2147483648
    %v1169 = vsel %vm1167, %v1168, %v1166
    %v1170 = vrsqrt.pop %v1118
    %v1171 = vmul.f32 %v1118, %v1170
    %vm1172 = vcmp.eq.f32.partialorder %v1118, inf
    %v1173 = vsel %vm1172, %v1118, %v1171
    %vm1174 = vcmp.eq.f32.partialorder %v1118, 0.0
    %v1175 = vand.u32 %v1118, 2147483648
    %v1176 = vsel %vm1174, %v1175, %v1173
    %v1177 = vrsqrt.pop %v1119
    %v1178 = vmul.f32 %v1119, %v1177
    %vm1179 = vcmp.eq.f32.partialorder %v1119, inf
    %v1180 = vsel %vm1179, %v1119, %v1178
    %vm1181 = vcmp.eq.f32.partialorder %v1119, 0.0
    %v1182 = vand.u32 %v1119, 2147483648
    %v1183 = vsel %vm1181, %v1182, %v1180
    %v1184 = vrsqrt.pop %v1120
    %v1185 = vmul.f32 %v1120, %v1184
    %vm1186 = vcmp.eq.f32.partialorder %v1120, inf
    %v1187 = vsel %vm1186, %v1120, %v1185
    %vm1188 = vcmp.eq.f32.partialorder %v1120, 0.0
    %v1189 = vand.u32 %v1120, 2147483648
    %v1190 = vsel %vm1188, %v1189, %v1187
    %v1191 = vrsqrt.pop %v1121
    %v1192 = vmul.f32 %v1121, %v1191
    %vm1193 = vcmp.eq.f32.partialorder %v1121, inf
    %v1194 = vsel %vm1193, %v1121, %v1192
    %vm1195 = vcmp.eq.f32.partialorder %v1121, 0.0
    %v1196 = vand.u32 %v1121, 2147483648
    %v1197 = vsel %vm1195, %v1196, %v1194
    %v1198 = vrsqrt.pop %v1122
    %v1199 = vmul.f32 %v1122, %v1198
    %vm1200 = vcmp.eq.f32.partialorder %v1122, inf
    %v1201 = vsel %vm1200, %v1122, %v1199
    %vm1202 = vcmp.eq.f32.partialorder %v1122, 0.0
    %v1203 = vand.u32 %v1122, 2147483648
    %v1204 = vsel %vm1202, %v1203, %v1201
    %v1205 = vrsqrt.pop %v1123
    %v1206 = vmul.f32 %v1123, %v1205
    %vm1207 = vcmp.eq.f32.partialorder %v1123, inf
    %v1208 = vsel %vm1207, %v1123, %v1206
    %vm1209 = vcmp.eq.f32.partialorder %v1123, 0.0
    %v1210 = vand.u32 %v1123, 2147483648
    %v1211 = vsel %vm1209, %v1210, %v1208
    %v1212 = vrsqrt.pop %v1124
    %v1213 = vmul.f32 %v1124, %v1212
    %vm1214 = vcmp.eq.f32.partialorder %v1124, inf
    %v1215 = vsel %vm1214, %v1124, %v1213
    %vm1216 = vcmp.eq.f32.partialorder %v1124, 0.0
    %v1217 = vand.u32 %v1124, 2147483648
    %v1218 = vsel %vm1216, %v1217, %v1215
    %v1219 = vrsqrt.pop %v1125
    %v1220 = vmul.f32 %v1125, %v1219
    %vm1221 = vcmp.eq.f32.partialorder %v1125, inf
    %v1222 = vsel %vm1221, %v1125, %v1220
    %vm1223 = vcmp.eq.f32.partialorder %v1125, 0.0
    %v1224 = vand.u32 %v1125, 2147483648
    %v1225 = vsel %vm1223, %v1224, %v1222
    %v1226 = vrsqrt.pop %v1126
    %v1227 = vmul.f32 %v1126, %v1226
    %vm1228 = vcmp.eq.f32.partialorder %v1126, inf
    %v1229 = vsel %vm1228, %v1126, %v1227
    %vm1230 = vcmp.eq.f32.partialorder %v1126, 0.0
    %v1231 = vand.u32 %v1126, 2147483648
    %v1232 = vsel %vm1230, %v1231, %v1229
    %v1233 = vrsqrt.pop %v1127
    %v1234 = vmul.f32 %v1127, %v1233
    %vm1235 = vcmp.eq.f32.partialorder %v1127, inf
    %v1236 = vsel %vm1235, %v1127, %v1234
    %vm1237 = vcmp.eq.f32.partialorder %v1127, 0.0
    %v1238 = vand.u32 %v1127, 2147483648
    %v1239 = vsel %vm1237, %v1238, %v1236
    %v1240 = vld [vmem:[%s8] sm:$0x1]
    %v1242 = vlaneseq
    %v1243 = vshrl.u32 %v1242, 7
    %v1244 = vsub.s32 0, %v1243
    %v1245 = vrot.slane %v1240, %v1244
    %v1247 = vmul.f32 %v1134, %v1245
    %v1248 = vmul.f32 %v1141, %v1245
    %v1249 = vmul.f32 %v1148, %v1245
    %v1250 = vmul.f32 %v1155, %v1245
    %v1251 = vmul.f32 %v1162, %v1245
    %v1252 = vmul.f32 %v1169, %v1245
    %v1253 = vmul.f32 %v1176, %v1245
    %v1254 = vmul.f32 %v1183, %v1245
    %v1255 = vmul.f32 %v1190, %v1245
    %v1256 = vmul.f32 %v1197, %v1245
    %v1257 = vmul.f32 %v1204, %v1245
    %v1258 = vmul.f32 %v1211, %v1245
    %v1259 = vmul.f32 %v1218, %v1245
    %v1260 = vmul.f32 %v1225, %v1245
    %v1261 = vmul.f32 %v1232, %v1245
    %v1262 = vmul.f32 %v1239, %v1245
    %v1263 = vld [vmem:[%s9] sm:$0xff]
    %v1264 = vld [vmem:[%s9 + $0x8] sm:$0xff]
    %v1266 = vsel %vm57, %v1032, 0
    %v1269 = vsel %vm57, %v1033, 0
    %v1272 = vsel %vm57, %v1034, 0
    %v1275 = vsel %vm57, %v1035, 0
    %v1278 = vsel %vm57, %v1036, 0
    %v1281 = vsel %vm57, %v1037, 0
    %v1284 = vsel %vm57, %v1038, 0
    %v1287 = vsel %vm57, %v1039, 0
    %v1290 = vsel %vm57, %v1040, 0
    %v1293 = vsel %vm57, %v1041, 0
    %v1296 = vsel %vm57, %v1042, 0
    %v1299 = vsel %vm57, %v1043, 0
    %v1302 = vsel %vm57, %v1044, 0
    %v1305 = vsel %vm57, %v1045, 0
    %v1308 = vsel %vm57, %v1046, 0
    %v1311 = vsel %vm57, %v1047, 0
    %1313 = vmatprep.subr.mxu0 0.0
    %1314 = vmatpush1.msra.mxu0 0.0
    %1315 = vmatprep.subr.mxu0 0.0
    %1316 = vmatpush1.msra.mxu0 0.0
    %1317 = vmatprep.subr.mxu0 0.0
    %1318 = vmatpush1.msra.mxu0 0.0
    %1319 = vmatprep.subr.mxu0 0.0
    %1320 = vmatpush1.msra.mxu0 0.0
    %1321 = vmatprep.subr.mxu0 0.0
    %1322 = vmatpush1.msra.mxu0 0.0
    %1323 = vmatprep.subr.mxu0 0.0
    %1324 = vmatpush1.msra.mxu0 0.0
    %1325 = vmatprep.subr.mxu0 0.0
    %1326 = vmatpush1.msra.mxu0 0.0
    %1327 = vmatprep.subr.mxu0 0.0
    %1328 = vmatpush1.msra.mxu0 0.0
    %1329 = vmatprep.subr.mxu0 0.0
    %1330 = vmatpush1.msra.mxu0 0.0
    %1331 = vmatprep.subr.mxu0 0.0
    %1332 = vmatpush1.msra.mxu0 0.0
    %1333 = vmatprep.subr.mxu0 0.0
    %1334 = vmatpush1.msra.mxu0 0.0
    %1335 = vmatprep.subr.mxu0 0.0
    %1336 = vmatpush1.msra.mxu0 0.0
    %1337 = vmatprep.subr.mxu0 0.0
    %1338 = vmatpush1.msra.mxu0 0.0
    %1339 = vmatprep.subr.mxu0 0.0
    %1340 = vmatpush1.msra.mxu0 0.0
    %1341 = vmatprep.subr.mxu0 0.0
    %1342 = vmatpush1.msra.mxu0 %v1264
    %1343 = vmatprep.subr.mxu0 0.0
    %1344 = vmatpush1.msra.mxu0 %v1263
    %1345 = vmatprep.subr.mxu0 0.0
    %1346 = vmatpush2.msra.mxu0 0.0
    %1347 = vmatprep.subr.mxu0 0.0
    %1348 = vmatpush2.msra.mxu0 0.0
    %1349 = vmatprep.subr.mxu0 0.0
    %1350 = vmatpush2.msra.mxu0 0.0
    %1351 = vmatprep.subr.mxu0 0.0
    %1352 = vmatpush2.msra.mxu0 0.0
    %1353 = vmatprep.subr.mxu0 0.0
    %1354 = vmatpush2.msra.mxu0 0.0
    %1355 = vmatprep.subr.mxu0 0.0
    %1356 = vmatpush2.msra.mxu0 0.0
    %1357 = vmatprep.subr.mxu0 0.0
    %1358 = vmatpush2.msra.mxu0 0.0
    %1359 = vmatprep.subr.mxu0 0.0
    %1360 = vmatpush2.msra.mxu0 0.0
    %1361 = vmatprep.subr.mxu0 0.0
    %1362 = vmatpush2.msra.mxu0 0.0
    %1363 = vmatprep.subr.mxu0 0.0
    %1364 = vmatpush2.msra.mxu0 0.0
    %1365 = vmatprep.subr.mxu0 0.0
    %1366 = vmatpush2.msra.mxu0 0.0
    %1367 = vmatprep.subr.mxu0 0.0
    %1368 = vmatpush2.msra.mxu0 0.0
    %1369 = vmatprep.subr.mxu0 0.0
    %1370 = vmatpush2.msra.mxu0 0.0
    %1371 = vmatprep.subr.mxu0 0.0
    %1372 = vmatpush2.msra.mxu0 0.0
    %1373 = vmatprep.subr.mxu0 0.0
    %1374 = vmatpush2.msra.mxu0 0.0
    %1375 = vmatprep.subr.mxu0 0.0
    %1376 = vmatpush2.msra.mxu0 0.0
    %1377 = vmatprep.mubr.f32.mxu0 0.0
    %1378 = vmatmul.mubr.f32.gmra.mxu0 %v1266
    %v1379 = vpop.f32.mrf.mxu0
    %v1380 = vadd.f32 0.0, %v1379
    %v1381 = vpop.f32.mrf.mxu0
    %1382 = vmatprep.mubr.f32.mxu0 0.0
    %1383 = vmatmul.mubr.f32.gmra.mxu0 %v1269
    %v1384 = vpop.f32.mrf.mxu0
    %v1385 = vadd.f32 0.0, %v1384
    %v1386 = vpop.f32.mrf.mxu0
    %1387 = vmatprep.mubr.f32.mxu0 0.0
    %1388 = vmatmul.mubr.f32.gmra.mxu0 %v1272
    %v1389 = vpop.f32.mrf.mxu0
    %v1390 = vadd.f32 0.0, %v1389
    %v1391 = vpop.f32.mrf.mxu0
    %1392 = vmatprep.mubr.f32.mxu0 0.0
    %1393 = vmatmul.mubr.f32.gmra.mxu0 %v1275
    %v1394 = vpop.f32.mrf.mxu0
    %v1395 = vadd.f32 0.0, %v1394
    %v1396 = vpop.f32.mrf.mxu0
    %1397 = vmatprep.mubr.f32.mxu0 0.0
    %1398 = vmatmul.mubr.f32.gmra.mxu0 %v1278
    %v1399 = vpop.f32.mrf.mxu0
    %v1400 = vadd.f32 0.0, %v1399
    %v1401 = vpop.f32.mrf.mxu0
    %1402 = vmatprep.mubr.f32.mxu0 0.0
    %1403 = vmatmul.mubr.f32.gmra.mxu0 %v1281
    %v1404 = vpop.f32.mrf.mxu0
    %v1405 = vadd.f32 0.0, %v1404
    %v1406 = vpop.f32.mrf.mxu0
    %1407 = vmatprep.mubr.f32.mxu0 0.0
    %1408 = vmatmul.mubr.f32.gmra.mxu0 %v1284
    %v1409 = vpop.f32.mrf.mxu0
    %v1410 = vadd.f32 0.0, %v1409
    %v1411 = vpop.f32.mrf.mxu0
    %1412 = vmatprep.mubr.f32.mxu0 0.0
    %1413 = vmatmul.mubr.f32.gmra.mxu0 %v1287
    %v1414 = vpop.f32.mrf.mxu0
    %v1415 = vadd.f32 0.0, %v1414
    %v1416 = vpop.f32.mrf.mxu0
    %1417 = vmatprep.mubr.f32.mxu0 0.0
    %1418 = vmatmul.mubr.f32.gmra.mxu0 %v1290
    %v1419 = vpop.f32.mrf.mxu0
    %v1420 = vadd.f32 0.0, %v1419
    %v1421 = vpop.f32.mrf.mxu0
    %1422 = vmatprep.mubr.f32.mxu0 0.0
    %1423 = vmatmul.mubr.f32.gmra.mxu0 %v1293
    %v1424 = vpop.f32.mrf.mxu0
    %v1425 = vadd.f32 0.0, %v1424
    %v1426 = vpop.f32.mrf.mxu0
    %1427 = vmatprep.mubr.f32.mxu0 0.0
    %1428 = vmatmul.mubr.f32.gmra.mxu0 %v1296
    %v1429 = vpop.f32.mrf.mxu0
    %v1430 = vadd.f32 0.0, %v1429
    %v1431 = vpop.f32.mrf.mxu0
    %1432 = vmatprep.mubr.f32.mxu0 0.0
    %1433 = vmatmul.mubr.f32.gmra.mxu0 %v1299
    %v1434 = vpop.f32.mrf.mxu0
    %v1435 = vadd.f32 0.0, %v1434
    %v1436 = vpop.f32.mrf.mxu0
    %1437 = vmatprep.mubr.f32.mxu0 0.0
    %1438 = vmatmul.mubr.f32.gmra.mxu0 %v1302
    %v1439 = vpop.f32.mrf.mxu0
    %v1440 = vadd.f32 0.0, %v1439
    %v1441 = vpop.f32.mrf.mxu0
    %1442 = vmatprep.mubr.f32.mxu0 0.0
    %1443 = vmatmul.mubr.f32.gmra.mxu0 %v1305
    %v1444 = vpop.f32.mrf.mxu0
    %v1445 = vadd.f32 0.0, %v1444
    %v1446 = vpop.f32.mrf.mxu0
    %1447 = vmatprep.mubr.f32.mxu0 0.0
    %1448 = vmatmul.mubr.f32.gmra.mxu0 %v1308
    %v1449 = vpop.f32.mrf.mxu0
    %v1450 = vadd.f32 0.0, %v1449
    %v1451 = vpop.f32.mrf.mxu0
    %1452 = vmatprep.mubr.f32.mxu0 0.0
    %1453 = vmatmul.mubr.f32.gmra.mxu0 %v1311
    %v1454 = vpop.f32.mrf.mxu0
    %v1455 = vadd.f32 0.0, %v1454
    %v1456 = vpop.f32.mrf.mxu0
    %1457 = vdwg.mxu0
    %v1458 = vadd.f32 %v1247, %v1380
    %v1459 = vadd.f32 %v1248, %v1385
    %v1460 = vadd.f32 %v1249, %v1390
    %v1461 = vadd.f32 %v1250, %v1395
    %v1462 = vadd.f32 %v1251, %v1400
    %v1463 = vadd.f32 %v1252, %v1405
    %v1464 = vadd.f32 %v1253, %v1410
    %v1465 = vadd.f32 %v1254, %v1415
    %v1466 = vadd.f32 %v1255, %v1420
    %v1467 = vadd.f32 %v1256, %v1425
    %v1468 = vadd.f32 %v1257, %v1430
    %v1469 = vadd.f32 %v1258, %v1435
    %v1470 = vadd.f32 %v1259, %v1440
    %v1471 = vadd.f32 %v1260, %v1445
    %v1472 = vadd.f32 %v1261, %v1450
    %v1473 = vadd.f32 %v1262, %v1455
    %v1474 = vld [vmem:[%s10] sm:$0x1]
    %v1476 = vlaneseq
    %v1477 = vshrl.u32 %v1476, 7
    %v1478 = vsub.s32 0, %v1477
    %v1479 = vrot.slane %v1474, %v1478
    %v1481 = vadd.f32 %v1458, %v1479
    %v1482 = vadd.f32 %v1459, %v1479
    %v1483 = vadd.f32 %v1460, %v1479
    %v1484 = vadd.f32 %v1461, %v1479
    %v1485 = vadd.f32 %v1462, %v1479
    %v1486 = vadd.f32 %v1463, %v1479
    %v1487 = vadd.f32 %v1464, %v1479
    %v1488 = vadd.f32 %v1465, %v1479
    %v1489 = vadd.f32 %v1466, %v1479
    %v1490 = vadd.f32 %v1467, %v1479
    %v1491 = vadd.f32 %v1468, %v1479
    %v1492 = vadd.f32 %v1469, %v1479
    %v1493 = vadd.f32 %v1470, %v1479
    %v1494 = vadd.f32 %v1471, %v1479
    %v1495 = vadd.f32 %v1472, %v1479
    %v1496 = vadd.f32 %v1473, %v1479
    %v1497 = vmul.f32 %v1481, %v1481
    %v1498 = vmul.f32 %v1482, %v1482
    %v1499 = vmul.f32 %v1483, %v1483
    %v1500 = vmul.f32 %v1484, %v1484
    %v1501 = vmul.f32 %v1485, %v1485
    %v1502 = vmul.f32 %v1486, %v1486
    %v1503 = vmul.f32 %v1487, %v1487
    %v1504 = vmul.f32 %v1488, %v1488
    %v1505 = vmul.f32 %v1489, %v1489
    %v1506 = vmul.f32 %v1490, %v1490
    %v1507 = vmul.f32 %v1491, %v1491
    %v1508 = vmul.f32 %v1492, %v1492
    %v1509 = vmul.f32 %v1493, %v1493
    %v1510 = vmul.f32 %v1494, %v1494
    %v1511 = vmul.f32 %v1495, %v1495
    %v1512 = vmul.f32 %v1496, %v1496
    %vm1513 = vcmask 64512
    %v1514 = vsel %vm1513, %v1497, 0.0
    %1515 = vadd.xlane.f32.xlu0 %v1514
    %v1516 = vpop.xlane.xlu0 %1515
    %v1517 = vsel %vm1513, %v1498, 0.0
    %1518 = vadd.xlane.f32.xlu0 %v1517
    %v1519 = vpop.xlane.xlu0 %1518
    %v1520 = vsel %vm1513, %v1499, 0.0
    %1521 = vadd.xlane.f32.xlu0 %v1520
    %v1522 = vpop.xlane.xlu0 %1521
    %v1523 = vsel %vm1513, %v1500, 0.0
    %1524 = vadd.xlane.f32.xlu0 %v1523
    %v1525 = vpop.xlane.xlu0 %1524
    %v1526 = vsel %vm1513, %v1501, 0.0
    %1527 = vadd.xlane.f32.xlu0 %v1526
    %v1528 = vpop.xlane.xlu0 %1527
    %v1529 = vsel %vm1513, %v1502, 0.0
    %1530 = vadd.xlane.f32.xlu0 %v1529
    %v1531 = vpop.xlane.xlu0 %1530
    %v1532 = vsel %vm1513, %v1503, 0.0
    %1533 = vadd.xlane.f32.xlu0 %v1532
    %v1534 = vpop.xlane.xlu0 %1533
    %v1535 = vsel %vm1513, %v1504, 0.0
    %1536 = vadd.xlane.f32.xlu0 %v1535
    %v1537 = vpop.xlane.xlu0 %1536
    %v1538 = vsel %vm1513, %v1505, 0.0
    %1539 = vadd.xlane.f32.xlu0 %v1538
    %v1540 = vpop.xlane.xlu0 %1539
    %v1541 = vsel %vm1513, %v1506, 0.0
    %1542 = vadd.xlane.f32.xlu0 %v1541
    %v1543 = vpop.xlane.xlu0 %1542
    %v1544 = vsel %vm1513, %v1507, 0.0
    %1545 = vadd.xlane.f32.xlu0 %v1544
    %v1546 = vpop.xlane.xlu0 %1545
    %v1547 = vsel %vm1513, %v1508, 0.0
    %1548 = vadd.xlane.f32.xlu0 %v1547
    %v1549 = vpop.xlane.xlu0 %1548
    %v1550 = vsel %vm1513, %v1509, 0.0
    %1551 = vadd.xlane.f32.xlu0 %v1550
    %v1552 = vpop.xlane.xlu0 %1551
    %v1553 = vsel %vm1513, %v1510, 0.0
    %1554 = vadd.xlane.f32.xlu0 %v1553
    %v1555 = vpop.xlane.xlu0 %1554
    %v1556 = vsel %vm1513, %v1511, 0.0
    %1557 = vadd.xlane.f32.xlu0 %v1556
    %v1558 = vpop.xlane.xlu0 %1557
    %v1559 = vsel %vm1513, %v1512, 0.0
    %1560 = vadd.xlane.f32.xlu0 %v1559
    %v1561 = vpop.xlane.xlu0 %1560
    %v1562 = vadd.f32 %v1516, 1.0
    %v1563 = vadd.f32 %v1519, 1.0
    %v1564 = vadd.f32 %v1522, 1.0
    %v1565 = vadd.f32 %v1525, 1.0
    %v1566 = vadd.f32 %v1528, 1.0
    %v1567 = vadd.f32 %v1531, 1.0
    %v1568 = vadd.f32 %v1534, 1.0
    %v1569 = vadd.f32 %v1537, 1.0
    %v1570 = vadd.f32 %v1540, 1.0
    %v1571 = vadd.f32 %v1543, 1.0
    %v1572 = vadd.f32 %v1546, 1.0
    %v1573 = vadd.f32 %v1549, 1.0
    %v1574 = vadd.f32 %v1552, 1.0
    %v1575 = vadd.f32 %v1555, 1.0
    %v1576 = vadd.f32 %v1558, 1.0
    %v1577 = vadd.f32 %v1561, 1.0
    %v1578 = vrsqrt.pop %v1562
    %v1579 = vmul.f32 %v1562, %v1578
    %vm1580 = vcmp.eq.f32.partialorder %v1562, inf
    %v1581 = vsel %vm1580, %v1562, %v1579
    %vm1582 = vcmp.eq.f32.partialorder %v1562, 0.0
    %v1583 = vand.u32 %v1562, 2147483648
    %v1584 = vsel %vm1582, %v1583, %v1581
    %v1585 = vrsqrt.pop %v1563
    %v1586 = vmul.f32 %v1563, %v1585
    %vm1587 = vcmp.eq.f32.partialorder %v1563, inf
    %v1588 = vsel %vm1587, %v1563, %v1586
    %vm1589 = vcmp.eq.f32.partialorder %v1563, 0.0
    %v1590 = vand.u32 %v1563, 2147483648
    %v1591 = vsel %vm1589, %v1590, %v1588
    %v1592 = vrsqrt.pop %v1564
    %v1593 = vmul.f32 %v1564, %v1592
    %vm1594 = vcmp.eq.f32.partialorder %v1564, inf
    %v1595 = vsel %vm1594, %v1564, %v1593
    %vm1596 = vcmp.eq.f32.partialorder %v1564, 0.0
    %v1597 = vand.u32 %v1564, 2147483648
    %v1598 = vsel %vm1596, %v1597, %v1595
    %v1599 = vrsqrt.pop %v1565
    %v1600 = vmul.f32 %v1565, %v1599
    %vm1601 = vcmp.eq.f32.partialorder %v1565, inf
    %v1602 = vsel %vm1601, %v1565, %v1600
    %vm1603 = vcmp.eq.f32.partialorder %v1565, 0.0
    %v1604 = vand.u32 %v1565, 2147483648
    %v1605 = vsel %vm1603, %v1604, %v1602
    %v1606 = vrsqrt.pop %v1566
    %v1607 = vmul.f32 %v1566, %v1606
    %vm1608 = vcmp.eq.f32.partialorder %v1566, inf
    %v1609 = vsel %vm1608, %v1566, %v1607
    %vm1610 = vcmp.eq.f32.partialorder %v1566, 0.0
    %v1611 = vand.u32 %v1566, 2147483648
    %v1612 = vsel %vm1610, %v1611, %v1609
    %v1613 = vrsqrt.pop %v1567
    %v1614 = vmul.f32 %v1567, %v1613
    %vm1615 = vcmp.eq.f32.partialorder %v1567, inf
    %v1616 = vsel %vm1615, %v1567, %v1614
    %vm1617 = vcmp.eq.f32.partialorder %v1567, 0.0
    %v1618 = vand.u32 %v1567, 2147483648
    %v1619 = vsel %vm1617, %v1618, %v1616
    %v1620 = vrsqrt.pop %v1568
    %v1621 = vmul.f32 %v1568, %v1620
    %vm1622 = vcmp.eq.f32.partialorder %v1568, inf
    %v1623 = vsel %vm1622, %v1568, %v1621
    %vm1624 = vcmp.eq.f32.partialorder %v1568, 0.0
    %v1625 = vand.u32 %v1568, 2147483648
    %v1626 = vsel %vm1624, %v1625, %v1623
    %v1627 = vrsqrt.pop %v1569
    %v1628 = vmul.f32 %v1569, %v1627
    %vm1629 = vcmp.eq.f32.partialorder %v1569, inf
    %v1630 = vsel %vm1629, %v1569, %v1628
    %vm1631 = vcmp.eq.f32.partialorder %v1569, 0.0
    %v1632 = vand.u32 %v1569, 2147483648
    %v1633 = vsel %vm1631, %v1632, %v1630
    %v1634 = vrsqrt.pop %v1570
    %v1635 = vmul.f32 %v1570, %v1634
    %vm1636 = vcmp.eq.f32.partialorder %v1570, inf
    %v1637 = vsel %vm1636, %v1570, %v1635
    %vm1638 = vcmp.eq.f32.partialorder %v1570, 0.0
    %v1639 = vand.u32 %v1570, 2147483648
    %v1640 = vsel %vm1638, %v1639, %v1637
    %v1641 = vrsqrt.pop %v1571
    %v1642 = vmul.f32 %v1571, %v1641
    %vm1643 = vcmp.eq.f32.partialorder %v1571, inf
    %v1644 = vsel %vm1643, %v1571, %v1642
    %vm1645 = vcmp.eq.f32.partialorder %v1571, 0.0
    %v1646 = vand.u32 %v1571, 2147483648
    %v1647 = vsel %vm1645, %v1646, %v1644
    %v1648 = vrsqrt.pop %v1572
    %v1649 = vmul.f32 %v1572, %v1648
    %vm1650 = vcmp.eq.f32.partialorder %v1572, inf
    %v1651 = vsel %vm1650, %v1572, %v1649
    %vm1652 = vcmp.eq.f32.partialorder %v1572, 0.0
    %v1653 = vand.u32 %v1572, 2147483648
    %v1654 = vsel %vm1652, %v1653, %v1651
    %v1655 = vrsqrt.pop %v1573
    %v1656 = vmul.f32 %v1573, %v1655
    %vm1657 = vcmp.eq.f32.partialorder %v1573, inf
    %v1658 = vsel %vm1657, %v1573, %v1656
    %vm1659 = vcmp.eq.f32.partialorder %v1573, 0.0
    %v1660 = vand.u32 %v1573, 2147483648
    %v1661 = vsel %vm1659, %v1660, %v1658
    %v1662 = vrsqrt.pop %v1574
    %v1663 = vmul.f32 %v1574, %v1662
    %vm1664 = vcmp.eq.f32.partialorder %v1574, inf
    %v1665 = vsel %vm1664, %v1574, %v1663
    %vm1666 = vcmp.eq.f32.partialorder %v1574, 0.0
    %v1667 = vand.u32 %v1574, 2147483648
    %v1668 = vsel %vm1666, %v1667, %v1665
    %v1669 = vrsqrt.pop %v1575
    %v1670 = vmul.f32 %v1575, %v1669
    %vm1671 = vcmp.eq.f32.partialorder %v1575, inf
    %v1672 = vsel %vm1671, %v1575, %v1670
    %vm1673 = vcmp.eq.f32.partialorder %v1575, 0.0
    %v1674 = vand.u32 %v1575, 2147483648
    %v1675 = vsel %vm1673, %v1674, %v1672
    %v1676 = vrsqrt.pop %v1576
    %v1677 = vmul.f32 %v1576, %v1676
    %vm1678 = vcmp.eq.f32.partialorder %v1576, inf
    %v1679 = vsel %vm1678, %v1576, %v1677
    %vm1680 = vcmp.eq.f32.partialorder %v1576, 0.0
    %v1681 = vand.u32 %v1576, 2147483648
    %v1682 = vsel %vm1680, %v1681, %v1679
    %v1683 = vrsqrt.pop %v1577
    %v1684 = vmul.f32 %v1577, %v1683
    %vm1685 = vcmp.eq.f32.partialorder %v1577, inf
    %v1686 = vsel %vm1685, %v1577, %v1684
    %vm1687 = vcmp.eq.f32.partialorder %v1577, 0.0
    %v1688 = vand.u32 %v1577, 2147483648
    %v1689 = vsel %vm1687, %v1688, %v1686
    %1690 = vst.msk [vmem:[%s11] sm:$0xff] %vm1513, %v1481
    %1691 = vst.msk [vmem:[%s11 + $0x8] sm:$0xff] %vm1513, %v1482
    %1692 = vst.msk [vmem:[%s11 + $0x10] sm:$0xff] %vm1513, %v1483
    %1693 = vst.msk [vmem:[%s11 + $0x18] sm:$0xff] %vm1513, %v1484
    %1694 = vst.msk [vmem:[%s11 + $0x20] sm:$0xff] %vm1513, %v1485
    %1695 = vst.msk [vmem:[%s11 + $0x28] sm:$0xff] %vm1513, %v1486
    %1696 = vst.msk [vmem:[%s11 + $0x30] sm:$0xff] %vm1513, %v1487
    %1697 = vst.msk [vmem:[%s11 + $0x38] sm:$0xff] %vm1513, %v1488
    %1698 = vst.msk [vmem:[%s11 + $0x40] sm:$0xff] %vm1513, %v1489
    %1699 = vst.msk [vmem:[%s11 + $0x48] sm:$0xff] %vm1513, %v1490
    %1700 = vst.msk [vmem:[%s11 + $0x50] sm:$0xff] %vm1513, %v1491
    %1701 = vst.msk [vmem:[%s11 + $0x58] sm:$0xff] %vm1513, %v1492
    %1702 = vst.msk [vmem:[%s11 + $0x60] sm:$0xff] %vm1513, %v1493
    %1703 = vst.msk [vmem:[%s11 + $0x68] sm:$0xff] %vm1513, %v1494
    %1704 = vst.msk [vmem:[%s11 + $0x70] sm:$0xff] %vm1513, %v1495
    %1705 = vst.msk [vmem:[%s11 + $0x78] sm:$0xff] %vm1513, %v1496
    %vm1706 = vcmask 72768
    %1707 = vst.msk [vmem:[%s11] sm:$0xff] %vm1706, %v1584
    %1708 = vst.msk [vmem:[%s11 + $0x8] sm:$0xff] %vm1706, %v1591
    %1709 = vst.msk [vmem:[%s11 + $0x10] sm:$0xff] %vm1706, %v1598
    %1710 = vst.msk [vmem:[%s11 + $0x18] sm:$0xff] %vm1706, %v1605
    %1711 = vst.msk [vmem:[%s11 + $0x20] sm:$0xff] %vm1706, %v1612
    %1712 = vst.msk [vmem:[%s11 + $0x28] sm:$0xff] %vm1706, %v1619
    %1713 = vst.msk [vmem:[%s11 + $0x30] sm:$0xff] %vm1706, %v1626
    %1714 = vst.msk [vmem:[%s11 + $0x38] sm:$0xff] %vm1706, %v1633
    %1715 = vst.msk [vmem:[%s11 + $0x40] sm:$0xff] %vm1706, %v1640
    %1716 = vst.msk [vmem:[%s11 + $0x48] sm:$0xff] %vm1706, %v1647
    %1717 = vst.msk [vmem:[%s11 + $0x50] sm:$0xff] %vm1706, %v1654
    %1718 = vst.msk [vmem:[%s11 + $0x58] sm:$0xff] %vm1706, %v1661
    %1719 = vst.msk [vmem:[%s11 + $0x60] sm:$0xff] %vm1706, %v1668
    %1720 = vst.msk [vmem:[%s11 + $0x68] sm:$0xff] %vm1706, %v1675
    %1721 = vst.msk [vmem:[%s11 + $0x70] sm:$0xff] %vm1706, %v1682
    %1722 = vst.msk [vmem:[%s11 + $0x78] sm:$0xff] %vm1706, %v1689
    %1723 = vxpose.xlu0.b32.start [1/16] %v1481, 128
    %1724 = vxpose.xlu0.b32.cont [2/16] %v1482, 128
    %1725 = vxpose.xlu0.b32.cont [3/16] %v1483, 128
    %1726 = vxpose.xlu0.b32.cont [4/16] %v1484, 128
    %1727 = vxpose.xlu0.b32.cont [5/16] %v1485, 128
    %1728 = vxpose.xlu0.b32.cont [6/16] %v1486, 128
    %1729 = vxpose.xlu0.b32.cont [7/16] %v1487, 128
    %1730 = vxpose.xlu0.b32.cont [8/16] %v1488, 128
    %1731 = vxpose.xlu0.b32.cont [9/16] %v1489, 128
    %1732 = vxpose.xlu0.b32.cont [10/16] %v1490, 128
    %1733 = vxpose.xlu0.b32.cont [11/16] %v1491, 128
    %1734 = vxpose.xlu0.b32.cont [12/16] %v1492, 128
    %1735 = vxpose.xlu0.b32.cont [13/16] %v1493, 128
    %1736 = vxpose.xlu0.b32.cont [14/16] %v1494, 128
    %1737 = vxpose.xlu0.b32.cont [15/16] %v1495, 128
    %1738 = vxpose.xlu0.b32.end [16/16] %v1496, 128
    %v1739 = vpop.trf.xlu0
    %v1740 = vpop.trf.xlu0
    %v1741 = vpop.trf.xlu0
    %v1742 = vpop.trf.xlu0
    %v1743 = vpop.trf.xlu0
    %v1744 = vpop.trf.xlu0
    %v1745 = vpop.trf.xlu0
    %v1746 = vpop.trf.xlu0
    %v1747 = vpop.trf.xlu0
    %v1748 = vpop.trf.xlu0
    %v1749 = vpop.trf.xlu0
    %v1750 = vpop.trf.xlu0
    %v1751 = vpop.trf.xlu0
    %v1752 = vpop.trf.xlu0
    %v1753 = vpop.trf.xlu0
    %v1754 = vpop.trf.xlu0
    %v1755 = vsub.f32 0.0, %v1739
    %1756 = vst [vmem:[#allocation2] sm:$0xff] %v1755
    %v1757 = vmul.f32 %v1739, %v1739
    %v1758 = vrot.slane %v1757, 4
    %v1759 = vadd.f32 %v1757, %v1758
    %v1760 = vrot.slane %v1759, 2
    %v1761 = vadd.f32 %v1759, %v1760
    %v1762 = vrot.slane %v1761, 1
    %v1763 = vadd.f32 %v1761, %v1762
    %v1764 = vadd.f32 %v1763, 1.0
    %v1765 = vrsqrt.pop %v1764
    %v1766 = vmul.f32 %v1764, %v1765
    %vm1767 = vcmp.eq.f32.partialorder %v1764, inf
    %v1768 = vsel %vm1767, %v1764, %v1766
    %vm1769 = vcmp.eq.f32.partialorder %v1764, 0.0
    %v1770 = vand.u32 %v1764, 2147483648
    %v1771 = vsel %vm1769, %v1770, %v1768
    %1772 = vst [vmem:[#allocation2 + $0x8] sm:$0x1] %v1771
    // Predicated region
    $region46: #{tpu_custom_call.1} parent=1 // pred_check
      _
    $region47: #{tpu_custom_call.1} parent=1 // pred_check_branch
      %1774 = sbr.rel (0) target = $region49
    $region48: #{tpu_custom_call.1} parent=1 // pred_region
      _
    $region49: #{tpu_custom_call.1} parent=1 // pred_fallthru
      _
    // Predicated region
    $region50: #{tpu_custom_call.1} parent=1 // pred_check
      _
    $region51: #{tpu_custom_call.1} parent=1 // pred_check_branch
      %1776 = sbr.rel (0) target = $region53
    $region52: #{tpu_custom_call.1} parent=1 // pred_region
      %s1778 = ssub.s32 256, 256
      %1779 = vsyncadd [#allocation3], %s1778
      %s1780 = sshll.u32 [#allocation2], 4
      %s1781 = int_to_ptr.vmem [resolvable:$true] %s1780
      %1786 = dma.vmem_to_hbm [thread:$0]  %s1781, 256, %s12, [#allocation3], 128, 128, 8
    $region53: #{tpu_custom_call.1} parent=1 // pred_fallthru
      _
    // Predicated region
    $region54: #{tpu_custom_call.1} parent=1 // pred_check
      _
    $region55: #{tpu_custom_call.1} parent=1 // pred_check_branch
      %1788 = sbr.rel (0) target = $region57
    $region56: #{tpu_custom_call.1} parent=1 // pred_region
      _
    $region57: #{tpu_custom_call.1} parent=1 // pred_fallthru
      _
    // Predicated region
    $region58: #{tpu_custom_call.1} parent=1 // pred_check
      _
    $region59: #{tpu_custom_call.1} parent=1 // pred_check_branch
      %1790 = sbr.rel (0) target = $region61
    $region60: #{tpu_custom_call.1} parent=1 // pred_region
      %1791 = dma.done [#allocation3], 256
    $region61: #{tpu_custom_call.1} parent=1 // pred_fallthru
      _
    %1792 = vsyncpa [#allocation3], 1

</llo_original>
